<compile_context>
chip_gen: v5e
topology: v5e:2x2
jax: 0.10.0
libtpu: 0.0.40
codegen_flags: <defaults>
</compile_context>

<pallas_src>
import functools

import jax
import jax.numpy as jnp
from jax.experimental import pallas as pl
from jax.experimental.pallas import tpu as pltpu


def _layernorm(x, gamma, beta, eps=1e-5):
    mean = jnp.mean(x, axis=-1, keepdims=True)
    var = jnp.mean((x - mean) ** 2, axis=-1, keepdims=True)
    return (x - mean) * jax.lax.rsqrt(var + eps) * gamma + beta


def decoder_block_kernel(x_ref, mask_ref,
                         wqkv_ref, bqkv_ref, wo_ref, bo_ref,
                         g1_ref, be1_ref,
                         w1_ref, b1_ref, w2_ref, b2_ref,
                         g2_ref, be2_ref,
                         o_ref,
                         *, head, q_k_size, v_size, f_chunk):
    S = x_ref.shape[1]
    HK = head * q_k_size

    x = x_ref[0].astype(jnp.float32)                  # (S, E) residual path, f32
    x_bf = x.astype(jnp.bfloat16)                     # MXU operand

    # --- fused QKV projection: one bf16 MXU matmul, f32 accumulation --------
    # (1/sqrt(dk) is already folded into Wq / bq at parameter-prep time.)
    qkv = jnp.dot(x_bf, wqkv_ref[...], preferred_element_type=jnp.float32)
    qkv = qkv + bqkv_ref[...]                         # (S, 2*HK+HV) f32

    q_bf = qkv[:, :HK].astype(jnp.bfloat16)
    k_bf = qkv[:, HK:2 * HK].astype(jnp.bfloat16)
    v_bf = qkv[:, 2 * HK:].astype(jnp.bfloat16)

    masked = mask_ref[0] > 0.5                        # (S, S); True = mask out

    # --- per-head attention; results kept in vregs, no VMEM slab ------------
    z_heads = []
    for h in range(head):                             # static unroll (head small)
        qh = q_bf[:, h * q_k_size:(h + 1) * q_k_size]
        kh = k_bf[:, h * q_k_size:(h + 1) * q_k_size]
        vh = v_bf[:, h * v_size:(h + 1) * v_size]
        # q @ k^T without an explicit transpose
        sc = jax.lax.dot_general(qh, kh, (((1,), (1,)), ((), ())),
                                 preferred_element_type=jnp.float32)
        sc = jnp.where(masked, jnp.float32(-1e9), sc)
        sc = sc - jnp.max(sc, axis=-1, keepdims=True)
        p = jnp.exp(sc)
        inv = 1.0 / jnp.sum(p, axis=-1, keepdims=True)   # exact recip, (S,1) only
        p = p * inv
        zh = jnp.dot(p.astype(jnp.bfloat16), vh,
                     preferred_element_type=jnp.float32)
        z_heads.append(zh)

    z = jnp.concatenate(z_heads, axis=1).astype(jnp.bfloat16)   # (S, head*v_size)

    # --- output projection + add & norm 1 -----------------------------------
    attn = jnp.dot(z, wo_ref[...], preferred_element_type=jnp.float32) + bo_ref[...]
    r1 = _layernorm(attn + x, g1_ref[...], be1_ref[...])
    r1_bf = r1.astype(jnp.bfloat16)

    # --- feed forward (accumulated over F chunks) + add & norm 2 ------------
    F = w1_ref.shape[1]
    ffn = jnp.zeros_like(r1)
    for j in range(0, F, f_chunk):                    # static unroll over F chunks
        c = min(f_chunk, F - j)
        h_j = jnp.dot(r1_bf, w1_ref[:, j:j + c],
                      preferred_element_type=jnp.float32) + b1_ref[:, j:j + c]
        h_j = jnp.maximum(h_j, 0.0)
        ffn = ffn + jnp.dot(h_j.astype(jnp.bfloat16), w2_ref[j:j + c, :],
                            preferred_element_type=jnp.float32)
    ffn = ffn + b2_ref[...]

    out = _layernorm(ffn + r1, g2_ref[...], be2_ref[...])
    o_ref[0] = out.astype(o_ref.dtype)


def _vmem_limit_bytes():
    """~100 MiB on 128 MiB parts (v5e/v6e), ~51 MiB on 64 MiB parts (v7x)."""
    try:
        cap = pltpu.get_tpu_info().vmem_capacity_bytes
    except Exception:
        cap = 64 * 1024 * 1024
    return int(min(cap * 0.8, 100 * 1024 * 1024))


def prepare_params(params, *, q_k_size):
    """One-time weight prep (call at parameter-load time, NOT per forward):
    fuse Q/K/V weights, cast matmul weights to bf16, fold 1/sqrt(dk) into Wq/bq."""
    scale = 1.0 / jnp.sqrt(jnp.float32(q_k_size))
    wqkv = jnp.concatenate(
        [params["wq"] * scale, params["wk"], params["wv"]], axis=1
    ).astype(jnp.bfloat16)
    bqkv = jnp.concatenate(
        [params["bq"] * scale, params["bk"], params["bv"]], axis=1
    ).astype(jnp.float32)
    return {
        "wqkv": wqkv, "bqkv": bqkv,
        "wo": params["wo"].astype(jnp.bfloat16), "bo": params["bo"],
        "g1": params["g1"], "be1": params["be1"],
        "w1": params["w1"].astype(jnp.bfloat16), "b1": params["b1"],
        "w2": params["w2"].astype(jnp.bfloat16), "b2": params["b2"],
        "g2": params["g2"], "be2": params["be2"],
    }


def decoder_block(x, attn_mask, prepped, *, head, q_k_size, v_size):
    """x: (B, S, E) float32; attn_mask: (B, S, S), >0.5 means masked."""
    B, S, E = x.shape
    F = prepped["w1"].shape[1]
    f_chunk = min(F, 512)

    kernel = functools.partial(decoder_block_kernel, head=head,
                               q_k_size=q_k_size, v_size=v_size,
                               f_chunk=f_chunk)

    per_batch_x = pl.BlockSpec((1, S, E), lambda b: (b, 0, 0))
    per_batch_mask = pl.BlockSpec((1, S, S), lambda b: (b, 0, 0))
    # Weights are constant across the grid: whole-array VMEM residency,
    # single copy, no per-step double-buffering.
    wspec = pl.BlockSpec(memory_space=pltpu.MemorySpace.VMEM)
    in_specs = [per_batch_x, per_batch_mask] + [wspec] * 12

    return pl.pallas_call(
        kernel,
        grid=(B,),
        in_specs=in_specs,
        out_specs=per_batch_x,
        out_shape=jax.ShapeDtypeStruct((B, S, E), x.dtype),
        compiler_params=pltpu.CompilerParams(
            dimension_semantics=("parallel",),
            vmem_limit_bytes=_vmem_limit_bytes()),
    )(x, attn_mask.astype(jnp.float32),
      prepped["wqkv"], prepped["bqkv"], prepped["wo"], prepped["bo"],
      prepped["g1"], prepped["be1"], prepped["w1"], prepped["b1"],
      prepped["w2"], prepped["b2"], prepped["g2"], prepped["be2"])


def decoder_block_ref(x, attn_mask, params, *, head, q_k_size, v_size):
    """Pure-JAX f32 reference for correctness checking."""
    B, S, E = x.shape
    q = x @ params["wq"] + params["bq"]
    k = x @ params["wk"] + params["bk"]
    v = x @ params["wv"] + params["bv"]
    q = q.reshape(B, S, head, q_k_size).transpose(0, 2, 1, 3)
    k = k.reshape(B, S, head, q_k_size).transpose(0, 2, 1, 3)
    v = v.reshape(B, S, head, v_size).transpose(0, 2, 1, 3)
    scores = jnp.einsum("bhqd,bhkd->bhqk", q, k) / jnp.sqrt(jnp.float32(q_k_size))
    scores = jnp.where(attn_mask[:, None, :, :] > 0.5, -1e9, scores)
    p = jax.nn.softmax(scores, axis=-1)
    z = jnp.einsum("bhqk,bhkd->bhqd", p, v).transpose(0, 2, 1, 3).reshape(B, S, head * v_size)
    attn_out = z @ params["wo"] + params["bo"]

    def ln(y, g, b, eps=1e-5):
        m = y.mean(-1, keepdims=True)
        var = ((y - m) ** 2).mean(-1, keepdims=True)
        return (y - m) / jnp.sqrt(var + eps) * g + b

    r1 = ln(attn_out + x, params["g1"], params["be1"])
    hdn = jax.nn.relu(r1 @ params["w1"] + params["b1"])
    ffn = hdn @ params["w2"] + params["b2"]
    return ln(ffn + r1, params["g2"], params["be2"])


def init_params(key, emb_size, q_k_size, v_size, f_size, head):
    HK, HV = head * q_k_size, head * v_size
    ks = jax.random.split(key, 8)
    s = 0.05
    return {
        "wq": jax.random.normal(ks[0], (emb_size, HK), jnp.float32) * s,
        "bq": jnp.zeros((1, HK), jnp.float32),
        "wk": jax.random.normal(ks[1], (emb_size, HK), jnp.float32) * s,
        "bk": jnp.zeros((1, HK), jnp.float32),
        "wv": jax.random.normal(ks[2], (emb_size, HV), jnp.float32) * s,
        "bv": jnp.zeros((1, HV), jnp.float32),
        "wo": jax.random.normal(ks[3], (HV, emb_size), jnp.float32) * s,
        "bo": jnp.zeros((1, emb_size), jnp.float32),
        "g1": jnp.ones((1, emb_size), jnp.float32),
        "be1": jnp.zeros((1, emb_size), jnp.float32),
        "w1": jax.random.normal(ks[4], (emb_size, f_size), jnp.float32) * s,
        "b1": jnp.zeros((1, f_size), jnp.float32),
        "w2": jax.random.normal(ks[5], (f_size, emb_size), jnp.float32) * s,
        "b2": jnp.zeros((1, emb_size), jnp.float32),
        "g2": jnp.ones((1, emb_size), jnp.float32),
        "be2": jnp.zeros((1, emb_size), jnp.float32),
    }


if __name__ == "__main__":
    # Small but lane-dense shapes (E, F multiples of 128; S multiple of 8).
    B, S = 2, 16
    emb_size, q_k_size, v_size, f_size, head = 128, 32, 32, 256, 4

    key = jax.random.PRNGKey(0)
    kx, kp = jax.random.split(key)
    x = jax.random.normal(kx, (B, S, emb_size), jnp.float32)
    params = init_params(kp, emb_size, q_k_size, v_size, f_size, head)
    prepped = prepare_params(params, q_k_size=q_k_size)   # one-time weight prep

    # causal mask: 1.0 where position is masked (future positions)
    causal = jnp.triu(jnp.ones((S, S), jnp.float32), k=1)
    attn_mask = jnp.broadcast_to(causal, (B, S, S))

    out = decoder_block(x, attn_mask, prepped,
                        head=head, q_k_size=q_k_size, v_size=v_size)
    out = jax.block_until_ready(out)

    ref = decoder_block_ref(x, attn_mask, params,
                            head=head, q_k_size=q_k_size, v_size=v_size)
    assert out.shape == (B, S, emb_size)
    # Tolerance covers the intentional bf16-operand / f32-accumulation MXU path
    # (softmax/LayerNorm math and the reciprocal are exact f32).
    max_err = float(jnp.max(jnp.abs(out - ref)))
    assert jnp.allclose(out, ref, atol=5e-2, rtol=5e-2), \
        f"mismatch vs reference (max abs err {max_err})"
    print("KERNEL_OK")
</pallas_src>

<mosaic_0001>
module attributes {stable_mosaic.version = 11 : i64} {
  func.func @decoder_block_kernel(%arg0: i32, %arg1: memref<1x16x128xf32, #tpu.memory_space<vmem>>, %arg2: memref<1x16x16xf32, #tpu.memory_space<vmem>>, %arg3: memref<128x384xbf16, #tpu.memory_space<vmem>>, %arg4: memref<1x384xf32, #tpu.memory_space<vmem>>, %arg5: memref<128x128xbf16, #tpu.memory_space<vmem>>, %arg6: memref<1x128xf32, #tpu.memory_space<vmem>>, %arg7: memref<1x128xf32, #tpu.memory_space<vmem>>, %arg8: memref<1x128xf32, #tpu.memory_space<vmem>>, %arg9: memref<128x256xbf16, #tpu.memory_space<vmem>>, %arg10: memref<1x256xf32, #tpu.memory_space<vmem>>, %arg11: memref<256x128xbf16, #tpu.memory_space<vmem>>, %arg12: memref<1x128xf32, #tpu.memory_space<vmem>>, %arg13: memref<1x128xf32, #tpu.memory_space<vmem>>, %arg14: memref<1x128xf32, #tpu.memory_space<vmem>>, %arg15: memref<1x16x128xf32, #tpu.memory_space<vmem>>) attributes {dimension_semantics = [#tpu.dimension_semantics<parallel>], iteration_bounds = array<i64: 2>, scalar_prefetch = 0 : i64, scratch_operands = 0 : i64, tpu.core_type = #tpu.core_type<tc>, window_params = [{transform_indices = @transform_0, window_bounds = array<i64: 1, 16, 128>}, {transform_indices = @transform_1, window_bounds = array<i64: 1, 16, 16>}, {pipeline_mode = #tpu.pipeline_mode<synchronous>, transform_indices = @transform_2, window_bounds = array<i64: 128, 384>}, {pipeline_mode = #tpu.pipeline_mode<synchronous>, transform_indices = @transform_3, window_bounds = array<i64: 1, 384>}, {pipeline_mode = #tpu.pipeline_mode<synchronous>, transform_indices = @transform_4, window_bounds = array<i64: 128, 128>}, {pipeline_mode = #tpu.pipeline_mode<synchronous>, transform_indices = @transform_5, window_bounds = array<i64: 1, 128>}, {pipeline_mode = #tpu.pipeline_mode<synchronous>, transform_indices = @transform_6, window_bounds = array<i64: 1, 128>}, {pipeline_mode = #tpu.pipeline_mode<synchronous>, transform_indices = @transform_7, window_bounds = array<i64: 1, 128>}, {pipeline_mode = #tpu.pipeline_mode<synchronous>, transform_indices = @transform_8, window_bounds = array<i64: 128, 256>}, {pipeline_mode = #tpu.pipeline_mode<synchronous>, transform_indices = @transform_9, window_bounds = array<i64: 1, 256>}, {pipeline_mode = #tpu.pipeline_mode<synchronous>, transform_indices = @transform_10, window_bounds = array<i64: 256, 128>}, {pipeline_mode = #tpu.pipeline_mode<synchronous>, transform_indices = @transform_11, window_bounds = array<i64: 1, 128>}, {pipeline_mode = #tpu.pipeline_mode<synchronous>, transform_indices = @transform_12, window_bounds = array<i64: 1, 128>}, {pipeline_mode = #tpu.pipeline_mode<synchronous>, transform_indices = @transform_13, window_bounds = array<i64: 1, 128>}, {transform_indices = @transform_14, window_bounds = array<i64: 1, 16, 128>}]} {
    %c0 = arith.constant 0 : index
    %c0_0 = arith.constant 0 : index
    %c0_1 = arith.constant 0 : index
    %0 = vector.load %arg1[%c0, %c0_0, %c0_1] : memref<1x16x128xf32, #tpu.memory_space<vmem>>, vector<1x16x128xf32>
    %1 = vector.shape_cast %0 : vector<1x16x128xf32> to vector<16x128xf32>
    %2 = arith.truncf %1 : vector<16x128xf32> to vector<16x128xbf16>
    %c0_2 = arith.constant 0 : index
    %c0_3 = arith.constant 0 : index
    %3 = vector.load %arg3[%c0_2, %c0_3] : memref<128x384xbf16, #tpu.memory_space<vmem>>, vector<128x384xbf16>
    %cst = arith.constant dense<0.000000e+00> : vector<16x384xf32>
    %4 = tpu.matmul %2, %3, %cst {dimension_numbers = #tpu.dot_dimension_numbers<[1], [0], [0], [1], [0, 0, 1, 1], [], []>} : vector<16x128xbf16>, vector<128x384xbf16>, vector<16x384xf32> -> vector<16x384xf32>
    %c0_4 = arith.constant 0 : index
    %c0_5 = arith.constant 0 : index
    %5 = vector.load %arg4[%c0_4, %c0_5] : memref<1x384xf32, #tpu.memory_space<vmem>>, vector<1x384xf32>
    %6 = vector.broadcast %5 : vector<1x384xf32> to vector<16x384xf32>
    %7 = arith.addf %4, %6 : vector<16x384xf32>
    %8 = vector.extract_strided_slice %7 {offsets = [0, 0], sizes = [16, 128], strides = [1, 1]} : vector<16x384xf32> to vector<16x128xf32>
    %9 = arith.truncf %8 : vector<16x128xf32> to vector<16x128xbf16>
    %10 = vector.extract_strided_slice %7 {offsets = [0, 128], sizes = [16, 128], strides = [1, 1]} : vector<16x384xf32> to vector<16x128xf32>
    %11 = arith.truncf %10 : vector<16x128xf32> to vector<16x128xbf16>
    %12 = vector.extract_strided_slice %7 {offsets = [0, 256], sizes = [16, 128], strides = [1, 1]} : vector<16x384xf32> to vector<16x128xf32>
    %13 = arith.truncf %12 : vector<16x128xf32> to vector<16x128xbf16>
    %c0_6 = arith.constant 0 : index
    %c0_7 = arith.constant 0 : index
    %c0_8 = arith.constant 0 : index
    %14 = vector.load %arg2[%c0_6, %c0_7, %c0_8] : memref<1x16x16xf32, #tpu.memory_space<vmem>>, vector<1x16x16xf32>
    %15 = vector.shape_cast %14 : vector<1x16x16xf32> to vector<16x16xf32>
    %cst_9 = arith.constant 5.000000e-01 : f32
    %16 = vector.broadcast %cst_9 : f32 to vector<16x16xf32>
    %17 = arith.cmpf ogt, %15, %16 : vector<16x16xf32>
    %18 = vector.extract_strided_slice %9 {offsets = [0, 0], sizes = [16, 32], strides = [1, 1]} : vector<16x128xbf16> to vector<16x32xbf16>
    %19 = vector.extract_strided_slice %11 {offsets = [0, 0], sizes = [16, 32], strides = [1, 1]} : vector<16x128xbf16> to vector<16x32xbf16>
    %20 = vector.extract_strided_slice %13 {offsets = [0, 0], sizes = [16, 32], strides = [1, 1]} : vector<16x128xbf16> to vector<16x32xbf16>
    %cst_10 = arith.constant dense<0.000000e+00> : vector<16x16xf32>
    %21 = tpu.matmul %18, %19, %cst_10 {dimension_numbers = #tpu.dot_dimension_numbers<[1], [1], [0], [0], [0, 0, 1, 0], [], []>} : vector<16x32xbf16>, vector<16x32xbf16>, vector<16x16xf32> -> vector<16x16xf32>
    %cst_11 = arith.constant -1.000000e+09 : f32
    %22 = vector.broadcast %cst_11 : f32 to vector<16x16xf32>
    %23 = arith.select %17, %22, %21 : vector<16x16xi1>, vector<16x16xf32>
    %cst_12 = arith.constant dense<0xFF800000> : vector<16xf32>
    %24 = vector.multi_reduction <maximumf>, %23, %cst_12 [1] : vector<16x16xf32> to vector<16xf32>
    %25 = vector.shape_cast %24 : vector<16xf32> to vector<16x1xf32>
    %26 = vector.broadcast %25 : vector<16x1xf32> to vector<16x16xf32>
    %27 = arith.subf %23, %26 : vector<16x16xf32>
    %28 = math.exp %27 : vector<16x16xf32>
    %cst_13 = arith.constant dense<0.000000e+00> : vector<16xf32>
    %29 = vector.multi_reduction <add>, %28, %cst_13 [1] : vector<16x16xf32> to vector<16xf32>
    %30 = vector.shape_cast %29 : vector<16xf32> to vector<16x1xf32>
    %cst_14 = arith.constant 1.000000e+00 : f32
    %31 = vector.broadcast %cst_14 : f32 to vector<16x1xf32>
    %32 = arith.divf %31, %30 : vector<16x1xf32>
    %33 = vector.broadcast %32 : vector<16x1xf32> to vector<16x16xf32>
    %34 = arith.mulf %28, %33 : vector<16x16xf32>
    %35 = arith.truncf %34 : vector<16x16xf32> to vector<16x16xbf16>
    %cst_15 = arith.constant dense<0.000000e+00> : vector<16x32xf32>
    %36 = tpu.matmul %35, %20, %cst_15 {dimension_numbers = #tpu.dot_dimension_numbers<[1], [0], [0], [1], [0, 0, 1, 1], [], []>} : vector<16x16xbf16>, vector<16x32xbf16>, vector<16x32xf32> -> vector<16x32xf32>
    %37 = vector.extract_strided_slice %9 {offsets = [0, 32], sizes = [16, 32], strides = [1, 1]} : vector<16x128xbf16> to vector<16x32xbf16>
    %38 = vector.extract_strided_slice %11 {offsets = [0, 32], sizes = [16, 32], strides = [1, 1]} : vector<16x128xbf16> to vector<16x32xbf16>
    %39 = vector.extract_strided_slice %13 {offsets = [0, 32], sizes = [16, 32], strides = [1, 1]} : vector<16x128xbf16> to vector<16x32xbf16>
    %cst_16 = arith.constant dense<0.000000e+00> : vector<16x16xf32>
    %40 = tpu.matmul %37, %38, %cst_16 {dimension_numbers = #tpu.dot_dimension_numbers<[1], [1], [0], [0], [0, 0, 1, 0], [], []>} : vector<16x32xbf16>, vector<16x32xbf16>, vector<16x16xf32> -> vector<16x16xf32>
    %cst_17 = arith.constant -1.000000e+09 : f32
    %41 = vector.broadcast %cst_17 : f32 to vector<16x16xf32>
    %42 = arith.select %17, %41, %40 : vector<16x16xi1>, vector<16x16xf32>
    %cst_18 = arith.constant dense<0xFF800000> : vector<16xf32>
    %43 = vector.multi_reduction <maximumf>, %42, %cst_18 [1] : vector<16x16xf32> to vector<16xf32>
    %44 = vector.shape_cast %43 : vector<16xf32> to vector<16x1xf32>
    %45 = vector.broadcast %44 : vector<16x1xf32> to vector<16x16xf32>
    %46 = arith.subf %42, %45 : vector<16x16xf32>
    %47 = math.exp %46 : vector<16x16xf32>
    %cst_19 = arith.constant dense<0.000000e+00> : vector<16xf32>
    %48 = vector.multi_reduction <add>, %47, %cst_19 [1] : vector<16x16xf32> to vector<16xf32>
    %49 = vector.shape_cast %48 : vector<16xf32> to vector<16x1xf32>
    %cst_20 = arith.constant 1.000000e+00 : f32
    %50 = vector.broadcast %cst_20 : f32 to vector<16x1xf32>
    %51 = arith.divf %50, %49 : vector<16x1xf32>
    %52 = vector.broadcast %51 : vector<16x1xf32> to vector<16x16xf32>
    %53 = arith.mulf %47, %52 : vector<16x16xf32>
    %54 = arith.truncf %53 : vector<16x16xf32> to vector<16x16xbf16>
    %cst_21 = arith.constant dense<0.000000e+00> : vector<16x32xf32>
    %55 = tpu.matmul %54, %39, %cst_21 {dimension_numbers = #tpu.dot_dimension_numbers<[1], [0], [0], [1], [0, 0, 1, 1], [], []>} : vector<16x16xbf16>, vector<16x32xbf16>, vector<16x32xf32> -> vector<16x32xf32>
    %56 = vector.extract_strided_slice %9 {offsets = [0, 64], sizes = [16, 32], strides = [1, 1]} : vector<16x128xbf16> to vector<16x32xbf16>
    %57 = vector.extract_strided_slice %11 {offsets = [0, 64], sizes = [16, 32], strides = [1, 1]} : vector<16x128xbf16> to vector<16x32xbf16>
    %58 = vector.extract_strided_slice %13 {offsets = [0, 64], sizes = [16, 32], strides = [1, 1]} : vector<16x128xbf16> to vector<16x32xbf16>
    %cst_22 = arith.constant dense<0.000000e+00> : vector<16x16xf32>
    %59 = tpu.matmul %56, %57, %cst_22 {dimension_numbers = #tpu.dot_dimension_numbers<[1], [1], [0], [0], [0, 0, 1, 0], [], []>} : vector<16x32xbf16>, vector<16x32xbf16>, vector<16x16xf32> -> vector<16x16xf32>
    %cst_23 = arith.constant -1.000000e+09 : f32
    %60 = vector.broadcast %cst_23 : f32 to vector<16x16xf32>
    %61 = arith.select %17, %60, %59 : vector<16x16xi1>, vector<16x16xf32>
    %cst_24 = arith.constant dense<0xFF800000> : vector<16xf32>
    %62 = vector.multi_reduction <maximumf>, %61, %cst_24 [1] : vector<16x16xf32> to vector<16xf32>
    %63 = vector.shape_cast %62 : vector<16xf32> to vector<16x1xf32>
    %64 = vector.broadcast %63 : vector<16x1xf32> to vector<16x16xf32>
    %65 = arith.subf %61, %64 : vector<16x16xf32>
    %66 = math.exp %65 : vector<16x16xf32>
    %cst_25 = arith.constant dense<0.000000e+00> : vector<16xf32>
    %67 = vector.multi_reduction <add>, %66, %cst_25 [1] : vector<16x16xf32> to vector<16xf32>
    %68 = vector.shape_cast %67 : vector<16xf32> to vector<16x1xf32>
    %cst_26 = arith.constant 1.000000e+00 : f32
    %69 = vector.broadcast %cst_26 : f32 to vector<16x1xf32>
    %70 = arith.divf %69, %68 : vector<16x1xf32>
    %71 = vector.broadcast %70 : vector<16x1xf32> to vector<16x16xf32>
    %72 = arith.mulf %66, %71 : vector<16x16xf32>
    %73 = arith.truncf %72 : vector<16x16xf32> to vector<16x16xbf16>
    %cst_27 = arith.constant dense<0.000000e+00> : vector<16x32xf32>
    %74 = tpu.matmul %73, %58, %cst_27 {dimension_numbers = #tpu.dot_dimension_numbers<[1], [0], [0], [1], [0, 0, 1, 1], [], []>} : vector<16x16xbf16>, vector<16x32xbf16>, vector<16x32xf32> -> vector<16x32xf32>
    %75 = vector.extract_strided_slice %9 {offsets = [0, 96], sizes = [16, 32], strides = [1, 1]} : vector<16x128xbf16> to vector<16x32xbf16>
    %76 = vector.extract_strided_slice %11 {offsets = [0, 96], sizes = [16, 32], strides = [1, 1]} : vector<16x128xbf16> to vector<16x32xbf16>
    %77 = vector.extract_strided_slice %13 {offsets = [0, 96], sizes = [16, 32], strides = [1, 1]} : vector<16x128xbf16> to vector<16x32xbf16>
    %cst_28 = arith.constant dense<0.000000e+00> : vector<16x16xf32>
    %78 = tpu.matmul %75, %76, %cst_28 {dimension_numbers = #tpu.dot_dimension_numbers<[1], [1], [0], [0], [0, 0, 1, 0], [], []>} : vector<16x32xbf16>, vector<16x32xbf16>, vector<16x16xf32> -> vector<16x16xf32>
    %cst_29 = arith.constant -1.000000e+09 : f32
    %79 = vector.broadcast %cst_29 : f32 to vector<16x16xf32>
    %80 = arith.select %17, %79, %78 : vector<16x16xi1>, vector<16x16xf32>
    %cst_30 = arith.constant dense<0xFF800000> : vector<16xf32>
    %81 = vector.multi_reduction <maximumf>, %80, %cst_30 [1] : vector<16x16xf32> to vector<16xf32>
    %82 = vector.shape_cast %81 : vector<16xf32> to vector<16x1xf32>
    %83 = vector.broadcast %82 : vector<16x1xf32> to vector<16x16xf32>
    %84 = arith.subf %80, %83 : vector<16x16xf32>
    %85 = math.exp %84 : vector<16x16xf32>
    %cst_31 = arith.constant dense<0.000000e+00> : vector<16xf32>
    %86 = vector.multi_reduction <add>, %85, %cst_31 [1] : vector<16x16xf32> to vector<16xf32>
    %87 = vector.shape_cast %86 : vector<16xf32> to vector<16x1xf32>
    %cst_32 = arith.constant 1.000000e+00 : f32
    %88 = vector.broadcast %cst_32 : f32 to vector<16x1xf32>
    %89 = arith.divf %88, %87 : vector<16x1xf32>
    %90 = vector.broadcast %89 : vector<16x1xf32> to vector<16x16xf32>
    %91 = arith.mulf %85, %90 : vector<16x16xf32>
    %92 = arith.truncf %91 : vector<16x16xf32> to vector<16x16xbf16>
    %cst_33 = arith.constant dense<0.000000e+00> : vector<16x32xf32>
    %93 = tpu.matmul %92, %77, %cst_33 {dimension_numbers = #tpu.dot_dimension_numbers<[1], [0], [0], [1], [0, 0, 1, 1], [], []>} : vector<16x16xbf16>, vector<16x32xbf16>, vector<16x32xf32> -> vector<16x32xf32>
    %94 = tpu.concatenate %36, %55, %74, %93 in 1 : vector<16x32xf32>, vector<16x32xf32>, vector<16x32xf32>, vector<16x32xf32> -> vector<16x128xf32>
    %95 = arith.truncf %94 : vector<16x128xf32> to vector<16x128xbf16>
    %c0_34 = arith.constant 0 : index
    %c0_35 = arith.constant 0 : index
    %96 = vector.load %arg5[%c0_34, %c0_35] : memref<128x128xbf16, #tpu.memory_space<vmem>>, vector<128x128xbf16>
    %cst_36 = arith.constant dense<0.000000e+00> : vector<16x128xf32>
    %97 = tpu.matmul %95, %96, %cst_36 {dimension_numbers = #tpu.dot_dimension_numbers<[1], [0], [0], [1], [0, 0, 1, 1], [], []>} : vector<16x128xbf16>, vector<128x128xbf16>, vector<16x128xf32> -> vector<16x128xf32>
    %c0_37 = arith.constant 0 : index
    %c0_38 = arith.constant 0 : index
    %98 = vector.load %arg6[%c0_37, %c0_38] : memref<1x128xf32, #tpu.memory_space<vmem>>, vector<1x128xf32>
    %99 = vector.broadcast %98 : vector<1x128xf32> to vector<16x128xf32>
    %100 = arith.addf %97, %99 : vector<16x128xf32>
    %101 = arith.addf %100, %1 : vector<16x128xf32>
    %c0_39 = arith.constant 0 : index
    %c0_40 = arith.constant 0 : index
    %102 = vector.load %arg7[%c0_39, %c0_40] : memref<1x128xf32, #tpu.memory_space<vmem>>, vector<1x128xf32>
    %c0_41 = arith.constant 0 : index
    %c0_42 = arith.constant 0 : index
    %103 = vector.load %arg8[%c0_41, %c0_42] : memref<1x128xf32, #tpu.memory_space<vmem>>, vector<1x128xf32>
    %cst_43 = arith.constant dense<0.000000e+00> : vector<16xf32>
    %104 = vector.multi_reduction <add>, %101, %cst_43 [1] : vector<16x128xf32> to vector<16xf32>
    %105 = vector.shape_cast %104 : vector<16xf32> to vector<16x1xf32>
    %cst_44 = arith.constant 1.280000e+02 : f32
    %106 = vector.broadcast %cst_44 : f32 to vector<16x1xf32>
    %107 = arith.divf %105, %106 : vector<16x1xf32>
    %108 = vector.broadcast %107 : vector<16x1xf32> to vector<16x128xf32>
    %109 = arith.subf %101, %108 : vector<16x128xf32>
    %110 = arith.mulf %109, %109 : vector<16x128xf32>
    %cst_45 = arith.constant dense<0.000000e+00> : vector<16xf32>
    %111 = vector.multi_reduction <add>, %110, %cst_45 [1] : vector<16x128xf32> to vector<16xf32>
    %112 = vector.shape_cast %111 : vector<16xf32> to vector<16x1xf32>
    %cst_46 = arith.constant 1.280000e+02 : f32
    %113 = vector.broadcast %cst_46 : f32 to vector<16x1xf32>
    %114 = arith.divf %112, %113 : vector<16x1xf32>
    %115 = vector.broadcast %107 : vector<16x1xf32> to vector<16x128xf32>
    %116 = arith.subf %101, %115 : vector<16x128xf32>
    %cst_47 = arith.constant 9.99999974E-6 : f32
    %117 = vector.broadcast %cst_47 : f32 to vector<16x1xf32>
    %118 = arith.addf %114, %117 : vector<16x1xf32>
    %119 = math.rsqrt %118 : vector<16x1xf32>
    %120 = vector.broadcast %119 : vector<16x1xf32> to vector<16x128xf32>
    %121 = arith.mulf %116, %120 : vector<16x128xf32>
    %122 = vector.broadcast %102 : vector<1x128xf32> to vector<16x128xf32>
    %123 = arith.mulf %121, %122 : vector<16x128xf32>
    %124 = vector.broadcast %103 : vector<1x128xf32> to vector<16x128xf32>
    %125 = arith.addf %123, %124 : vector<16x128xf32>
    %126 = arith.truncf %125 : vector<16x128xf32> to vector<16x128xbf16>
    %cst_48 = arith.constant 0.000000e+00 : f32
    %127 = vector.broadcast %cst_48 : f32 to vector<16x128xf32>
    %c0_49 = arith.constant 0 : index
    %c0_50 = arith.constant 0 : index
    %128 = vector.load %arg9[%c0_49, %c0_50] : memref<128x256xbf16, #tpu.memory_space<vmem>>, vector<128x256xbf16>
    %cst_51 = arith.constant dense<0.000000e+00> : vector<16x256xf32>
    %129 = tpu.matmul %126, %128, %cst_51 {dimension_numbers = #tpu.dot_dimension_numbers<[1], [0], [0], [1], [0, 0, 1, 1], [], []>} : vector<16x128xbf16>, vector<128x256xbf16>, vector<16x256xf32> -> vector<16x256xf32>
    %c0_52 = arith.constant 0 : index
    %c0_53 = arith.constant 0 : index
    %130 = vector.load %arg10[%c0_52, %c0_53] : memref<1x256xf32, #tpu.memory_space<vmem>>, vector<1x256xf32>
    %131 = vector.broadcast %130 : vector<1x256xf32> to vector<16x256xf32>
    %132 = arith.addf %129, %131 : vector<16x256xf32>
    %cst_54 = arith.constant 0.000000e+00 : f32
    %133 = vector.broadcast %cst_54 : f32 to vector<16x256xf32>
    %134 = arith.maximumf %132, %133 : vector<16x256xf32>
    %135 = arith.truncf %134 : vector<16x256xf32> to vector<16x256xbf16>
    %c0_55 = arith.constant 0 : index
    %c0_56 = arith.constant 0 : index
    %136 = vector.load %arg11[%c0_55, %c0_56] : memref<256x128xbf16, #tpu.memory_space<vmem>>, vector<256x128xbf16>
    %cst_57 = arith.constant dense<0.000000e+00> : vector<16x128xf32>
    %137 = tpu.matmul %135, %136, %cst_57 {dimension_numbers = #tpu.dot_dimension_numbers<[1], [0], [0], [1], [0, 0, 1, 1], [], []>} : vector<16x256xbf16>, vector<256x128xbf16>, vector<16x128xf32> -> vector<16x128xf32>
    %138 = arith.addf %127, %137 : vector<16x128xf32>
    %c0_58 = arith.constant 0 : index
    %c0_59 = arith.constant 0 : index
    %139 = vector.load %arg12[%c0_58, %c0_59] : memref<1x128xf32, #tpu.memory_space<vmem>>, vector<1x128xf32>
    %140 = vector.broadcast %139 : vector<1x128xf32> to vector<16x128xf32>
    %141 = arith.addf %138, %140 : vector<16x128xf32>
    %142 = arith.addf %141, %125 : vector<16x128xf32>
    %c0_60 = arith.constant 0 : index
    %c0_61 = arith.constant 0 : index
    %143 = vector.load %arg13[%c0_60, %c0_61] : memref<1x128xf32, #tpu.memory_space<vmem>>, vector<1x128xf32>
    %c0_62 = arith.constant 0 : index
    %c0_63 = arith.constant 0 : index
    %144 = vector.load %arg14[%c0_62, %c0_63] : memref<1x128xf32, #tpu.memory_space<vmem>>, vector<1x128xf32>
    %cst_64 = arith.constant dense<0.000000e+00> : vector<16xf32>
    %145 = vector.multi_reduction <add>, %142, %cst_64 [1] : vector<16x128xf32> to vector<16xf32>
    %146 = vector.shape_cast %145 : vector<16xf32> to vector<16x1xf32>
    %cst_65 = arith.constant 1.280000e+02 : f32
    %147 = vector.broadcast %cst_65 : f32 to vector<16x1xf32>
    %148 = arith.divf %146, %147 : vector<16x1xf32>
    %149 = vector.broadcast %148 : vector<16x1xf32> to vector<16x128xf32>
    %150 = arith.subf %142, %149 : vector<16x128xf32>
    %151 = arith.mulf %150, %150 : vector<16x128xf32>
    %cst_66 = arith.constant dense<0.000000e+00> : vector<16xf32>
    %152 = vector.multi_reduction <add>, %151, %cst_66 [1] : vector<16x128xf32> to vector<16xf32>
    %153 = vector.shape_cast %152 : vector<16xf32> to vector<16x1xf32>
    %cst_67 = arith.constant 1.280000e+02 : f32
    %154 = vector.broadcast %cst_67 : f32 to vector<16x1xf32>
    %155 = arith.divf %153, %154 : vector<16x1xf32>
    %156 = vector.broadcast %148 : vector<16x1xf32> to vector<16x128xf32>
    %157 = arith.subf %142, %156 : vector<16x128xf32>
    %cst_68 = arith.constant 9.99999974E-6 : f32
    %158 = vector.broadcast %cst_68 : f32 to vector<16x1xf32>
    %159 = arith.addf %155, %158 : vector<16x1xf32>
    %160 = math.rsqrt %159 : vector<16x1xf32>
    %161 = vector.broadcast %160 : vector<16x1xf32> to vector<16x128xf32>
    %162 = arith.mulf %157, %161 : vector<16x128xf32>
    %163 = vector.broadcast %143 : vector<1x128xf32> to vector<16x128xf32>
    %164 = arith.mulf %162, %163 : vector<16x128xf32>
    %165 = vector.broadcast %144 : vector<1x128xf32> to vector<16x128xf32>
    %166 = arith.addf %164, %165 : vector<16x128xf32>
    %c0_69 = arith.constant 0 : index
    %c0_70 = arith.constant 0 : index
    %c0_71 = arith.constant 0 : index
    %167 = vector.load %arg15[%c0_69, %c0_70, %c0_71] : memref<1x16x128xf32, #tpu.memory_space<vmem>>, vector<1x16x128xf32>
    %168 = vector.shape_cast %167 : vector<1x16x128xf32> to vector<16x128xf32>
    %169 = vector.shape_cast %166 : vector<16x128xf32> to vector<1x16x128xf32>
    tpu.vector_store %arg15[%c0_69, %c0_70, %c0_71], %169 {strides = array<i32>} : memref<1x16x128xf32, #tpu.memory_space<vmem>>, vector<1x16x128xf32>,
    return
  }
  func.func @transform_0(%arg0: i32) -> (i32, i32, i32) {
    %c0_i32 = arith.constant 0 : i32
    %c0_i32_0 = arith.constant 0 : i32
    %c0_i32_1 = arith.constant 0 : i32
    return %arg0, %c0_i32, %c0_i32_0 : i32, i32, i32
  }
  func.func @transform_1(%arg0: i32) -> (i32, i32, i32) {
    %c0_i32 = arith.constant 0 : i32
    %c0_i32_0 = arith.constant 0 : i32
    %c0_i32_1 = arith.constant 0 : i32
    return %arg0, %c0_i32, %c0_i32_0 : i32, i32, i32
  }
  func.func @transform_2(%arg0: i32) -> (i32, i32) {
    %c0_i32 = arith.constant 0 : i32
    %c0_i32_0 = arith.constant 0 : i32
    %c0_i32_1 = arith.constant 0 : i32
    return %c0_i32, %c0_i32_0 : i32, i32
  }
  func.func @transform_3(%arg0: i32) -> (i32, i32) {
    %c0_i32 = arith.constant 0 : i32
    %c0_i32_0 = arith.constant 0 : i32
    %c0_i32_1 = arith.constant 0 : i32
    return %c0_i32, %c0_i32_0 : i32, i32
  }
  func.func @transform_4(%arg0: i32) -> (i32, i32) {
    %c0_i32 = arith.constant 0 : i32
    %c0_i32_0 = arith.constant 0 : i32
    %c0_i32_1 = arith.constant 0 : i32
    return %c0_i32, %c0_i32_0 : i32, i32
  }
  func.func @transform_5(%arg0: i32) -> (i32, i32) {
    %c0_i32 = arith.constant 0 : i32
    %c0_i32_0 = arith.constant 0 : i32
    %c0_i32_1 = arith.constant 0 : i32
    return %c0_i32, %c0_i32_0 : i32, i32
  }
  func.func @transform_6(%arg0: i32) -> (i32, i32) {
    %c0_i32 = arith.constant 0 : i32
    %c0_i32_0 = arith.constant 0 : i32
    %c0_i32_1 = arith.constant 0 : i32
    return %c0_i32, %c0_i32_0 : i32, i32
  }
  func.func @transform_7(%arg0: i32) -> (i32, i32) {
    %c0_i32 = arith.constant 0 : i32
    %c0_i32_0 = arith.constant 0 : i32
    %c0_i32_1 = arith.constant 0 : i32
    return %c0_i32, %c0_i32_0 : i32, i32
  }
  func.func @transform_8(%arg0: i32) -> (i32, i32) {
    %c0_i32 = arith.constant 0 : i32
    %c0_i32_0 = arith.constant 0 : i32
    %c0_i32_1 = arith.constant 0 : i32
    return %c0_i32, %c0_i32_0 : i32, i32
  }
  func.func @transform_9(%arg0: i32) -> (i32, i32) {
    %c0_i32 = arith.constant 0 : i32
    %c0_i32_0 = arith.constant 0 : i32
    %c0_i32_1 = arith.constant 0 : i32
    return %c0_i32, %c0_i32_0 : i32, i32
  }
  func.func @transform_10(%arg0: i32) -> (i32, i32) {
    %c0_i32 = arith.constant 0 : i32
    %c0_i32_0 = arith.constant 0 : i32
    %c0_i32_1 = arith.constant 0 : i32
    return %c0_i32, %c0_i32_0 : i32, i32
  }
  func.func @transform_11(%arg0: i32) -> (i32, i32) {
    %c0_i32 = arith.constant 0 : i32
    %c0_i32_0 = arith.constant 0 : i32
    %c0_i32_1 = arith.constant 0 : i32
    return %c0_i32, %c0_i32_0 : i32, i32
  }
  func.func @transform_12(%arg0: i32) -> (i32, i32) {
    %c0_i32 = arith.constant 0 : i32
    %c0_i32_0 = arith.constant 0 : i32
    %c0_i32_1 = arith.constant 0 : i32
    return %c0_i32, %c0_i32_0 : i32, i32
  }
  func.func @transform_13(%arg0: i32) -> (i32, i32) {
    %c0_i32 = arith.constant 0 : i32
    %c0_i32_0 = arith.constant 0 : i32
    %c0_i32_1 = arith.constant 0 : i32
    return %c0_i32, %c0_i32_0 : i32, i32
  }
  func.func @transform_14(%arg0: i32) -> (i32, i32, i32) {
    %c0_i32 = arith.constant 0 : i32
    %c0_i32_0 = arith.constant 0 : i32
    %c0_i32_1 = arith.constant 0 : i32
    return %arg0, %c0_i32, %c0_i32_0 : i32, i32, i32
  }
}

</mosaic_0001>

<llo_original>
// kernel: tpu_custom_call.1
$region0: #{tpu_custom_call.1}
  #allocation0 [shape = 'u32[]', space=smem, size = 0x4, offset = 0x4, fixed_abs, tag = 'smem constant byte address 0x4 - core index']
  #allocation1 [shape = 'u32[72,128]{1,0:T(1,128)}', space=vmem, size = 0x9000, scoped, tag = 'internal scratch']
  %s0 = inlined_call_operand.hbm [shape: f32[2,16,128], index: 0, kind: input, shape index: {}]
  %s1 = inlined_call_operand.hbm [shape: f32[2,16,16], index: 1, kind: input, shape index: {}]
  %s2 = inlined_call_operand.hbm [shape: bf16[128,384], index: 2, kind: input, shape index: {}]
  %s3 = inlined_call_operand.hbm [shape: f32[1,384], index: 3, kind: input, shape index: {}]
  %s4 = inlined_call_operand.hbm [shape: bf16[128,128], index: 4, kind: input, shape index: {}]
  %s5 = inlined_call_operand.vmem [shape: f32[1,128], index: 5, kind: input, shape index: {}]
  %s6 = inlined_call_operand.vmem [shape: f32[1,128], index: 6, kind: input, shape index: {}]
  %s7 = inlined_call_operand.vmem [shape: f32[1,128], index: 7, kind: input, shape index: {}]
  %s8 = inlined_call_operand.hbm [shape: bf16[128,256], index: 8, kind: input, shape index: {}]
  %s9 = inlined_call_operand.vmem [shape: f32[1,256], index: 9, kind: input, shape index: {}]
  %s10 = inlined_call_operand.hbm [shape: bf16[256,128], index: 10, kind: input, shape index: {}]
  %s11 = inlined_call_operand.vmem [shape: f32[1,128], index: 11, kind: input, shape index: {}]
  %s12 = inlined_call_operand.vmem [shape: f32[1,128], index: 12, kind: input, shape index: {}]
  %s13 = inlined_call_operand.vmem [shape: f32[1,128], index: 13, kind: input, shape index: {}]
  %s14 = inlined_call_operand.hbm [shape: f32[2,16,128], index: 14, kind: output, shape index: {}]
  %s15 = sld [smem:[#allocation0]]
  $region117: #{tpu_custom_call.1} parent=0
    _
  %s17 = ssub.s32 1, %s15
  %s18 = scalar_select 0, %s17, %s15
  $region1: #{tpu_custom_call.1} parent=0
    #allocation2 [shape = 'u8[16384]{0}', space=vmem, size = 0x4000, scoped, tag = 'input window, operand 0']
    #allocation3 [shape = 's32[2]{0}', space=sflag, size = 0x8, scoped, tag = 'scoped memory for tpu_custom_call.1']
    #allocation4 [shape = 's32[2]{0}', space=sflag, size = 0x8, scoped, tag = 'scoped memory for tpu_custom_call.1']
    #allocation5 [shape = 'u8[16384]{0}', space=vmem, size = 0x4000, scoped, tag = 'input window, operand 1']
    #allocation6 [shape = 's32[2]{0}', space=sflag, size = 0x8, scoped, tag = 'scoped memory for tpu_custom_call.1']
    #allocation7 [shape = 'u8[98304]{0}', space=vmem, size = 0x18000, scoped, tag = 'input window, operand 2, single buffered']
    #allocation8 [shape = 'u8[1536]{0}', space=vmem, size = 0x800, scoped, tag = 'input window, operand 3, single buffered']
    #allocation9 [shape = 's32[1]{0}', space=sflag, size = 0x4, scoped, tag = 'scoped memory for tpu_custom_call.1']
    #allocation10 [shape = 'u8[32768]{0}', space=vmem, size = 0x8000, scoped, tag = 'input window, operand 4, single buffered']
    #allocation11 [shape = 'u8[65536]{0}', space=vmem, size = 0x10000, scoped, tag = 'input window, operand 8, single buffered']
    #allocation12 [shape = 's32[1]{0}', space=sflag, size = 0x4, scoped, tag = 'scoped memory for tpu_custom_call.1']
    #allocation13 [shape = 'u8[65536]{0}', space=vmem, size = 0x10000, scoped, tag = 'input window, operand 10, single buffered']
    #allocation14 [shape = 'u8[16384]{0}', space=vmem, size = 0x4000, scoped, tag = 'output window, operand 0']
    %19 = vsyncpa [#allocation3], 0
    %s20 = scalar_lea.sflag [#allocation3], 1
    %21 = vsyncpa %s20, 0
    %22 = vsyncpa [#allocation6], 0
    %s23 = scalar_lea.sflag [#allocation6], 1
    %24 = vsyncpa %s23, 0
    %25 = vsyncpa [#allocation9], 0
    %26 = vsyncpa [#allocation12], 0
    %27 = vsyncpa [#allocation4], 0
    %s28 = scalar_lea.sflag [#allocation4], 1
    %29 = vsyncpa %s28, 0
    loop: start=0, step=1, limit=4
    $region2: #{tpu_custom_call.1} parent=1 // loop_pre_header
      _
    $region3: #{tpu_custom_call.1} parent=1 // loop_header
      %s31 = sphi 0, %s35
      %p32 = scmp.ge.s32.totalorder %s31, 4
      %s41 = sphi 0, %s43
      %s44 = sphi 0, %s41
      %s45 = sphi 0, %s44
      %s61 = sphi 0, %s45
      %s67 = sphi 0, %s69
      %s70 = sphi 0, %s67
      %s71 = sphi 0, %s70
      %s87 = sphi 0, %s71
      %s91 = sphi 0, %s91
      %s93 = sphi 0, %s91
      %s94 = sphi 0, %s93
      %s108 = sphi 0, %s94
      %s112 = sphi 0, %s112
      %s114 = sphi 0, %s112
      %s115 = sphi 0, %s114
      %s129 = sphi 0, %s115
      %s133 = sphi 0, %s133
      %s135 = sphi 0, %s133
      %s136 = sphi 0, %s135
      %s150 = sphi 0, %s136
      %s154 = sphi 0, %s154
      %s156 = sphi 0, %s154
      %s157 = sphi 0, %s156
      %s171 = sphi 0, %s157
      %s175 = sphi 0, %s175
      %s177 = sphi 0, %s175
      %s178 = sphi 0, %s177
      %s192 = sphi 0, %s178
      %s196 = sphi 0, %s196
      %s198 = sphi 0, %s196
      %s199 = sphi 0, %s198
      %s213 = sphi 0, %s199
      %s217 = sphi 0, %s217
      %s219 = sphi 0, %s217
      %s220 = sphi 0, %s219
      %s234 = sphi 0, %s220
      %s238 = sphi 0, %s238
      %s240 = sphi 0, %s238
      %s241 = sphi 0, %s240
      %s255 = sphi 0, %s241
      %s259 = sphi 0, %s259
      %s261 = sphi 0, %s259
      %s262 = sphi 0, %s261
      %s276 = sphi 0, %s262
      %s280 = sphi 0, %s280
      %s282 = sphi 0, %s280
      %s283 = sphi 0, %s282
      %s297 = sphi 0, %s283
      %s301 = sphi 0, %s301
      %s303 = sphi 0, %s301
      %s304 = sphi 0, %s303
      %s318 = sphi 0, %s304
      %s322 = sphi 0, %s322
      %s324 = sphi 0, %s322
      %s325 = sphi 0, %s324
      %s339 = sphi 0, %s325
      %s345 = sphi 0, %s347
      %s348 = sphi 0, %s345
      %s349 = sphi 0, %s348
      %s365 = sphi 0, %s349
    $region4: #{tpu_custom_call.1} parent=1 // loop_header_branch
      %34 = sbr.rel (%p32) target = $region8
    $region5: #{tpu_custom_call.1} parent=1 // loop_body
      %s36 = ssub.s32 %s31, 1
      %s37 = ssub.s32 %s31, 2
      %s38 = sadd.s32 %s31, 1
      %s39 = ssub.s32 %s31, %s38
      %p40 = scmp.eq.s32.totalorder %s39, 0
      %s42 = sadd.s32 %s41, 1
      %s43 = scalar_select %p40, %s41, %s42
      %p46 = pneg %p40
      %p47 = scmp.eq.s32.totalorder %s31, 1
      %p48 = por %p46, %p47
      %p49 = scmp.ne.s32.totalorder %s41, %s44
      %p50 = scmp.eq.s32.totalorder %s31, 0
      %p51 = por %p49, %p50
      %p52 = scmp.ne.s32.totalorder %s41, %s44
      %p53 = scmp.eq.s32.totalorder %s36, 1
      %p54 = por %p52, %p53
      %p55 = scmp.ne.s32.totalorder %s44, %s45
      %p56 = scmp.eq.s32.totalorder %s36, 0
      %p57 = por %p55, %p56
      %p58 = scmp.ne.s32.totalorder %s44, %s45
      %p59 = scmp.eq.s32.totalorder %s37, 1
      %p60 = por %p58, %p59
      %p62 = scmp.ne.s32.totalorder %s45, %s61
      %p63 = scmp.eq.s32.totalorder %s37, 0
      %p64 = por %p62, %p63
      %s65 = ssub.s32 %s31, %s38
      %p66 = scmp.eq.s32.totalorder %s65, 0
      %s68 = sadd.s32 %s67, 1
      %s69 = scalar_select %p66, %s67, %s68
      %p72 = pneg %p66
      %p73 = scmp.eq.s32.totalorder %s31, 1
      %p74 = por %p72, %p73
      %p75 = scmp.ne.s32.totalorder %s67, %s70
      %p76 = scmp.eq.s32.totalorder %s31, 0
      %p77 = por %p75, %p76
      %p78 = scmp.ne.s32.totalorder %s67, %s70
      %p79 = scmp.eq.s32.totalorder %s36, 1
      %p80 = por %p78, %p79
      %p81 = scmp.ne.s32.totalorder %s70, %s71
      %p82 = scmp.eq.s32.totalorder %s36, 0
      %p83 = por %p81, %p82
      %p84 = scmp.ne.s32.totalorder %s70, %s71
      %p85 = scmp.eq.s32.totalorder %s37, 1
      %p86 = por %p84, %p85
      %p88 = scmp.ne.s32.totalorder %s71, %s87
      %p89 = scmp.eq.s32.totalorder %s37, 0
      %p90 = por %p88, %p89
      %s92 = sadd.s32 %s91, 1
      %p95 = scmp.eq.s32.totalorder %s31, 1
      %p96 = scmp.ne.s32.totalorder %s91, %s93
      %p97 = scmp.eq.s32.totalorder %s31, 0
      %p98 = por %p96, %p97
      %p99 = scmp.ne.s32.totalorder %s91, %s93
      %p100 = scmp.eq.s32.totalorder %s36, 1
      %p101 = por %p99, %p100
      %p102 = scmp.ne.s32.totalorder %s93, %s94
      %p103 = scmp.eq.s32.totalorder %s36, 0
      %p104 = por %p102, %p103
      %p105 = scmp.ne.s32.totalorder %s93, %s94
      %p106 = scmp.eq.s32.totalorder %s37, 1
      %p107 = por %p105, %p106
      %p109 = scmp.ne.s32.totalorder %s94, %s108
      %p110 = scmp.eq.s32.totalorder %s37, 0
      %p111 = por %p109, %p110
      %s113 = sadd.s32 %s112, 1
      %p116 = scmp.eq.s32.totalorder %s31, 1
      %p117 = scmp.ne.s32.totalorder %s112, %s114
      %p118 = scmp.eq.s32.totalorder %s31, 0
      %p119 = por %p117, %p118
      %p120 = scmp.ne.s32.totalorder %s112, %s114
      %p121 = scmp.eq.s32.totalorder %s36, 1
      %p122 = por %p120, %p121
      %p123 = scmp.ne.s32.totalorder %s114, %s115
      %p124 = scmp.eq.s32.totalorder %s36, 0
      %p125 = por %p123, %p124
      %p126 = scmp.ne.s32.totalorder %s114, %s115
      %p127 = scmp.eq.s32.totalorder %s37, 1
      %p128 = por %p126, %p127
      %p130 = scmp.ne.s32.totalorder %s115, %s129
      %p131 = scmp.eq.s32.totalorder %s37, 0
      %p132 = por %p130, %p131
      %s134 = sadd.s32 %s133, 1
      %p137 = scmp.eq.s32.totalorder %s31, 1
      %p138 = scmp.ne.s32.totalorder %s133, %s135
      %p139 = scmp.eq.s32.totalorder %s31, 0
      %p140 = por %p138, %p139
      %p141 = scmp.ne.s32.totalorder %s133, %s135
      %p142 = scmp.eq.s32.totalorder %s36, 1
      %p143 = por %p141, %p142
      %p144 = scmp.ne.s32.totalorder %s135, %s136
      %p145 = scmp.eq.s32.totalorder %s36, 0
      %p146 = por %p144, %p145
      %p147 = scmp.ne.s32.totalorder %s135, %s136
      %p148 = scmp.eq.s32.totalorder %s37, 1
      %p149 = por %p147, %p148
      %p151 = scmp.ne.s32.totalorder %s136, %s150
      %p152 = scmp.eq.s32.totalorder %s37, 0
      %p153 = por %p151, %p152
      %s155 = sadd.s32 %s154, 1
      %p158 = scmp.eq.s32.totalorder %s31, 1
      %p159 = scmp.ne.s32.totalorder %s154, %s156
      %p160 = scmp.eq.s32.totalorder %s31, 0
      %p161 = por %p159, %p160
      %p162 = scmp.ne.s32.totalorder %s154, %s156
      %p163 = scmp.eq.s32.totalorder %s36, 1
      %p164 = por %p162, %p163
      %p165 = scmp.ne.s32.totalorder %s156, %s157
      %p166 = scmp.eq.s32.totalorder %s36, 0
      %p167 = por %p165, %p166
      %p168 = scmp.ne.s32.totalorder %s156, %s157
      %p169 = scmp.eq.s32.totalorder %s37, 1
      %p170 = por %p168, %p169
      %p172 = scmp.ne.s32.totalorder %s157, %s171
      %p173 = scmp.eq.s32.totalorder %s37, 0
      %p174 = por %p172, %p173
      %s176 = sadd.s32 %s175, 1
      %p179 = scmp.eq.s32.totalorder %s31, 1
      %p180 = scmp.ne.s32.totalorder %s175, %s177
      %p181 = scmp.eq.s32.totalorder %s31, 0
      %p182 = por %p180, %p181
      %p183 = scmp.ne.s32.totalorder %s175, %s177
      %p184 = scmp.eq.s32.totalorder %s36, 1
      %p185 = por %p183, %p184
      %p186 = scmp.ne.s32.totalorder %s177, %s178
      %p187 = scmp.eq.s32.totalorder %s36, 0
      %p188 = por %p186, %p187
      %p189 = scmp.ne.s32.totalorder %s177, %s178
      %p190 = scmp.eq.s32.totalorder %s37, 1
      %p191 = por %p189, %p190
      %p193 = scmp.ne.s32.totalorder %s178, %s192
      %p194 = scmp.eq.s32.totalorder %s37, 0
      %p195 = por %p193, %p194
      %s197 = sadd.s32 %s196, 1
      %p200 = scmp.eq.s32.totalorder %s31, 1
      %p201 = scmp.ne.s32.totalorder %s196, %s198
      %p202 = scmp.eq.s32.totalorder %s31, 0
      %p203 = por %p201, %p202
      %p204 = scmp.ne.s32.totalorder %s196, %s198
      %p205 = scmp.eq.s32.totalorder %s36, 1
      %p206 = por %p204, %p205
      %p207 = scmp.ne.s32.totalorder %s198, %s199
      %p208 = scmp.eq.s32.totalorder %s36, 0
      %p209 = por %p207, %p208
      %p210 = scmp.ne.s32.totalorder %s198, %s199
      %p211 = scmp.eq.s32.totalorder %s37, 1
      %p212 = por %p210, %p211
      %p214 = scmp.ne.s32.totalorder %s199, %s213
      %p215 = scmp.eq.s32.totalorder %s37, 0
      %p216 = por %p214, %p215
      %s218 = sadd.s32 %s217, 1
      %p221 = scmp.eq.s32.totalorder %s31, 1
      %p222 = scmp.ne.s32.totalorder %s217, %s219
      %p223 = scmp.eq.s32.totalorder %s31, 0
      %p224 = por %p222, %p223
      %p225 = scmp.ne.s32.totalorder %s217, %s219
      %p226 = scmp.eq.s32.totalorder %s36, 1
      %p227 = por %p225, %p226
      %p228 = scmp.ne.s32.totalorder %s219, %s220
      %p229 = scmp.eq.s32.totalorder %s36, 0
      %p230 = por %p228, %p229
      %p231 = scmp.ne.s32.totalorder %s219, %s220
      %p232 = scmp.eq.s32.totalorder %s37, 1
      %p233 = por %p231, %p232
      %p235 = scmp.ne.s32.totalorder %s220, %s234
      %p236 = scmp.eq.s32.totalorder %s37, 0
      %p237 = por %p235, %p236
      %s239 = sadd.s32 %s238, 1
      %p242 = scmp.eq.s32.totalorder %s31, 1
      %p243 = scmp.ne.s32.totalorder %s238, %s240
      %p244 = scmp.eq.s32.totalorder %s31, 0
      %p245 = por %p243, %p244
      %p246 = scmp.ne.s32.totalorder %s238, %s240
      %p247 = scmp.eq.s32.totalorder %s36, 1
      %p248 = por %p246, %p247
      %p249 = scmp.ne.s32.totalorder %s240, %s241
      %p250 = scmp.eq.s32.totalorder %s36, 0
      %p251 = por %p249, %p250
      %p252 = scmp.ne.s32.totalorder %s240, %s241
      %p253 = scmp.eq.s32.totalorder %s37, 1
      %p254 = por %p252, %p253
      %p256 = scmp.ne.s32.totalorder %s241, %s255
      %p257 = scmp.eq.s32.totalorder %s37, 0
      %p258 = por %p256, %p257
      %s260 = sadd.s32 %s259, 1
      %p263 = scmp.eq.s32.totalorder %s31, 1
      %p264 = scmp.ne.s32.totalorder %s259, %s261
      %p265 = scmp.eq.s32.totalorder %s31, 0
      %p266 = por %p264, %p265
      %p267 = scmp.ne.s32.totalorder %s259, %s261
      %p268 = scmp.eq.s32.totalorder %s36, 1
      %p269 = por %p267, %p268
      %p270 = scmp.ne.s32.totalorder %s261, %s262
      %p271 = scmp.eq.s32.totalorder %s36, 0
      %p272 = por %p270, %p271
      %p273 = scmp.ne.s32.totalorder %s261, %s262
      %p274 = scmp.eq.s32.totalorder %s37, 1
      %p275 = por %p273, %p274
      %p277 = scmp.ne.s32.totalorder %s262, %s276
      %p278 = scmp.eq.s32.totalorder %s37, 0
      %p279 = por %p277, %p278
      %s281 = sadd.s32 %s280, 1
      %p284 = scmp.eq.s32.totalorder %s31, 1
      %p285 = scmp.ne.s32.totalorder %s280, %s282
      %p286 = scmp.eq.s32.totalorder %s31, 0
      %p287 = por %p285, %p286
      %p288 = scmp.ne.s32.totalorder %s280, %s282
      %p289 = scmp.eq.s32.totalorder %s36, 1
      %p290 = por %p288, %p289
      %p291 = scmp.ne.s32.totalorder %s282, %s283
      %p292 = scmp.eq.s32.totalorder %s36, 0
      %p293 = por %p291, %p292
      %p294 = scmp.ne.s32.totalorder %s282, %s283
      %p295 = scmp.eq.s32.totalorder %s37, 1
      %p296 = por %p294, %p295
      %p298 = scmp.ne.s32.totalorder %s283, %s297
      %p299 = scmp.eq.s32.totalorder %s37, 0
      %p300 = por %p298, %p299
      %s302 = sadd.s32 %s301, 1
      %p305 = scmp.eq.s32.totalorder %s31, 1
      %p306 = scmp.ne.s32.totalorder %s301, %s303
      %p307 = scmp.eq.s32.totalorder %s31, 0
      %p308 = por %p306, %p307
      %p309 = scmp.ne.s32.totalorder %s301, %s303
      %p310 = scmp.eq.s32.totalorder %s36, 1
      %p311 = por %p309, %p310
      %p312 = scmp.ne.s32.totalorder %s303, %s304
      %p313 = scmp.eq.s32.totalorder %s36, 0
      %p314 = por %p312, %p313
      %p315 = scmp.ne.s32.totalorder %s303, %s304
      %p316 = scmp.eq.s32.totalorder %s37, 1
      %p317 = por %p315, %p316
      %p319 = scmp.ne.s32.totalorder %s304, %s318
      %p320 = scmp.eq.s32.totalorder %s37, 0
      %p321 = por %p319, %p320
      %s323 = sadd.s32 %s322, 1
      %p326 = scmp.eq.s32.totalorder %s31, 1
      %p327 = scmp.ne.s32.totalorder %s322, %s324
      %p328 = scmp.eq.s32.totalorder %s31, 0
      %p329 = por %p327, %p328
      %p330 = scmp.ne.s32.totalorder %s322, %s324
      %p331 = scmp.eq.s32.totalorder %s36, 1
      %p332 = por %p330, %p331
      %p333 = scmp.ne.s32.totalorder %s324, %s325
      %p334 = scmp.eq.s32.totalorder %s36, 0
      %p335 = por %p333, %p334
      %p336 = scmp.ne.s32.totalorder %s324, %s325
      %p337 = scmp.eq.s32.totalorder %s37, 1
      %p338 = por %p336, %p337
      %p340 = scmp.ne.s32.totalorder %s325, %s339
      %p341 = scmp.eq.s32.totalorder %s37, 0
      %p342 = por %p340, %p341
      %s343 = ssub.s32 %s31, %s38
      %p344 = scmp.eq.s32.totalorder %s343, 0
      %s346 = sadd.s32 %s345, 1
      %s347 = scalar_select %p344, %s345, %s346
      %p350 = pneg %p344
      %p351 = scmp.eq.s32.totalorder %s31, 1
      %p352 = por %p350, %p351
      %p353 = scmp.ne.s32.totalorder %s345, %s348
      %p354 = scmp.eq.s32.totalorder %s31, 0
      %p355 = por %p353, %p354
      %p356 = scmp.ne.s32.totalorder %s345, %s348
      %p357 = scmp.eq.s32.totalorder %s36, 1
      %p358 = por %p356, %p357
      %p359 = scmp.ne.s32.totalorder %s348, %s349
      %p360 = scmp.eq.s32.totalorder %s36, 0
      %p361 = por %p359, %p360
      %p362 = scmp.ne.s32.totalorder %s348, %s349
      %p363 = scmp.eq.s32.totalorder %s37, 1
      %p364 = por %p362, %p363
      %p366 = scmp.ne.s32.totalorder %s349, %s365
      %p367 = scmp.eq.s32.totalorder %s37, 0
      %p368 = por %p366, %p367
      %p369 = scmp.le.s32.totalorder 1, %s31
      %p370 = scmp.lt.s32.totalorder %s31, 3
      %p371 = pnand %p369, %p370
      %p372 = pneg %p371
      // Predicated region
      $region9: #{tpu_custom_call.1} parent=5 // pred_check
        _
      $region10: #{tpu_custom_call.1} parent=5 // pred_check_branch
        %374 = sbr.rel (%p371) target = $region12
      $region11: #{tpu_custom_call.1} parent=5 // pred_region
        %s375 = ssub.s32 %s31, 1
        // Predicated region
        $region13: #{tpu_custom_call.1} parent=11 // pred_check
          %p376 = pneg %p104
        $region14: #{tpu_custom_call.1} parent=11 // pred_check_branch
          %378 = sbr.rel (%p376) target = $region16
        $region15: #{tpu_custom_call.1} parent=11 // pred_region
          %380 = vsyncadd [#allocation6], 0
          %s381 = sshll.u32 %s2, 4
          %s382 = int_to_ptr.hbm [resolvable:$true] %s381
          %s383 = sshll.u32 [#allocation7], 4
          %s384 = int_to_ptr.vmem [resolvable:$true] %s383
          %389 = dma.hbm_to_vmem [thread:$0]  %s382, 3072, %s384, [#allocation6], 192, 192, 12
        $region16: #{tpu_custom_call.1} parent=11 // pred_fallthru
          _
        // Predicated region
        $region17: #{tpu_custom_call.1} parent=11 // pred_check
          %p390 = pneg %p125
        $region18: #{tpu_custom_call.1} parent=11 // pred_check_branch
          %392 = sbr.rel (%p390) target = $region20
        $region19: #{tpu_custom_call.1} parent=11 // pred_region
          %394 = vsyncadd [#allocation9], 0
          %s396 = sshll.u32 %s3, 4
          %s397 = int_to_ptr.hbm [resolvable:$true] %s396
          %s398 = sshll.u32 [#allocation8], 4
          %s399 = int_to_ptr.vmem [resolvable:$true] %s398
          %401 = dma.hbm_to_vmem [thread:$0]  %s397, 48, %s399, [#allocation9]
        $region20: #{tpu_custom_call.1} parent=11 // pred_fallthru
          _
        // Predicated region
        $region21: #{tpu_custom_call.1} parent=11 // pred_check
          %p402 = pneg %p146
        $region22: #{tpu_custom_call.1} parent=11 // pred_check_branch
          %404 = sbr.rel (%p402) target = $region24
        $region23: #{tpu_custom_call.1} parent=11 // pred_region
          %406 = vsyncadd [#allocation9], 0
          %s407 = sshll.u32 %s4, 4
          %s408 = int_to_ptr.hbm [resolvable:$true] %s407
          %s409 = sshll.u32 [#allocation10], 4
          %s410 = int_to_ptr.vmem [resolvable:$true] %s409
          %415 = dma.hbm_to_vmem [thread:$0]  %s408, 1024, %s410, [#allocation9], 64, 64, 4
        $region24: #{tpu_custom_call.1} parent=11 // pred_fallthru
          _
        // Predicated region
        $region25: #{tpu_custom_call.1} parent=11 // pred_check
          %p416 = pneg %p167
        $region26: #{tpu_custom_call.1} parent=11 // pred_check_branch
          %418 = sbr.rel (%p416) target = $region28
        $region27: #{tpu_custom_call.1} parent=11 // pred_region
          _
        $region28: #{tpu_custom_call.1} parent=11 // pred_fallthru
          _
        // Predicated region
        $region29: #{tpu_custom_call.1} parent=11 // pred_check
          %p419 = pneg %p188
        $region30: #{tpu_custom_call.1} parent=11 // pred_check_branch
          %421 = sbr.rel (%p419) target = $region32
        $region31: #{tpu_custom_call.1} parent=11 // pred_region
          _
        $region32: #{tpu_custom_call.1} parent=11 // pred_fallthru
          _
        // Predicated region
        $region33: #{tpu_custom_call.1} parent=11 // pred_check
          %p422 = pneg %p209
        $region34: #{tpu_custom_call.1} parent=11 // pred_check_branch
          %424 = sbr.rel (%p422) target = $region36
        $region35: #{tpu_custom_call.1} parent=11 // pred_region
          _
        $region36: #{tpu_custom_call.1} parent=11 // pred_fallthru
          _
        // Predicated region
        $region37: #{tpu_custom_call.1} parent=11 // pred_check
          %p425 = pneg %p230
        $region38: #{tpu_custom_call.1} parent=11 // pred_check_branch
          %427 = sbr.rel (%p425) target = $region40
        $region39: #{tpu_custom_call.1} parent=11 // pred_region
          %429 = vsyncadd [#allocation12], 0
          %s430 = sshll.u32 %s8, 4
          %s431 = int_to_ptr.hbm [resolvable:$true] %s430
          %s432 = sshll.u32 [#allocation11], 4
          %s433 = int_to_ptr.vmem [resolvable:$true] %s432
          %438 = dma.hbm_to_vmem [thread:$0]  %s431, 2048, %s433, [#allocation12], 128, 128, 8
        $region40: #{tpu_custom_call.1} parent=11 // pred_fallthru
          _
        // Predicated region
        $region41: #{tpu_custom_call.1} parent=11 // pred_check
          %p439 = pneg %p251
        $region42: #{tpu_custom_call.1} parent=11 // pred_check_branch
          %441 = sbr.rel (%p439) target = $region44
        $region43: #{tpu_custom_call.1} parent=11 // pred_region
          _
        $region44: #{tpu_custom_call.1} parent=11 // pred_fallthru
          _
        // Predicated region
        $region45: #{tpu_custom_call.1} parent=11 // pred_check
          %p442 = pneg %p272
        $region46: #{tpu_custom_call.1} parent=11 // pred_check_branch
          %444 = sbr.rel (%p442) target = $region48
        $region47: #{tpu_custom_call.1} parent=11 // pred_region
          %446 = vsyncadd [#allocation12], 0
          %s447 = sshll.u32 %s10, 4
          %s448 = int_to_ptr.hbm [resolvable:$true] %s447
          %s449 = sshll.u32 [#allocation13], 4
          %s450 = int_to_ptr.vmem [resolvable:$true] %s449
          %455 = dma.hbm_to_vmem [thread:$0]  %s448, 2048, %s450, [#allocation12], 64, 64, 4
        $region48: #{tpu_custom_call.1} parent=11 // pred_fallthru
          _
        // Predicated region
        $region49: #{tpu_custom_call.1} parent=11 // pred_check
          %p456 = pneg %p293
        $region50: #{tpu_custom_call.1} parent=11 // pred_check_branch
          %458 = sbr.rel (%p456) target = $region52
        $region51: #{tpu_custom_call.1} parent=11 // pred_region
          _
        $region52: #{tpu_custom_call.1} parent=11 // pred_fallthru
          _
        // Predicated region
        $region53: #{tpu_custom_call.1} parent=11 // pred_check
          %p459 = pneg %p314
        $region54: #{tpu_custom_call.1} parent=11 // pred_check_branch
          %461 = sbr.rel (%p459) target = $region56
        $region55: #{tpu_custom_call.1} parent=11 // pred_region
          _
        $region56: #{tpu_custom_call.1} parent=11 // pred_fallthru
          _
        // Predicated region
        $region57: #{tpu_custom_call.1} parent=11 // pred_check
          %p462 = pneg %p335
        $region58: #{tpu_custom_call.1} parent=11 // pred_check_branch
          %464 = sbr.rel (%p462) target = $region60
        $region59: #{tpu_custom_call.1} parent=11 // pred_region
          _
        $region60: #{tpu_custom_call.1} parent=11 // pred_fallthru
          _
      $region12: #{tpu_custom_call.1} parent=5 // pred_fallthru
        _
      %p465 = scmp.lt.s32.totalorder %s31, 2
      // Predicated region
      $region61: #{tpu_custom_call.1} parent=5 // pred_check
        %p466 = pneg %p465
      $region62: #{tpu_custom_call.1} parent=5 // pred_check_branch
        %468 = sbr.rel (%p466) target = $region64
      $region63: #{tpu_custom_call.1} parent=5 // pred_region
        // Predicated region
        $region65: #{tpu_custom_call.1} parent=63 // pred_check
          %p469 = pneg %p51
        $region66: #{tpu_custom_call.1} parent=63 // pred_check_branch
          %471 = sbr.rel (%p469) target = $region68
        $region67: #{tpu_custom_call.1} parent=63 // pred_region
          %s472 = sand.u32 %s41, 1
          %s473 = scalar_lea.sflag [#allocation3], %s472
          %s474 = sand.u32 %s41, 1
          %s475 = smul.addr %s474, 16
          %s476 = scalar_lea.vmem [#allocation2], %s475
          %478 = vsyncadd %s473, 0
          %s479 = smul.addr %s31, 2
          %s480 = smul.addr %s479, 8
          %s481 = scalar_lea.hbm %s0, %s480
          %s482 = sshll.u32 %s481, 4
          %s483 = int_to_ptr.hbm [resolvable:$true] %s482
          %s484 = sshll.u32 %s476, 4
          %s485 = int_to_ptr.vmem [resolvable:$true] %s484
          %490 = dma.hbm_to_vmem [thread:$0]  %s483, 256, %s485, %s473, 128, 128, 8
        $region68: #{tpu_custom_call.1} parent=63 // pred_fallthru
          _
        // Predicated region
        $region69: #{tpu_custom_call.1} parent=63 // pred_check
          %p491 = pneg %p77
        $region70: #{tpu_custom_call.1} parent=63 // pred_check_branch
          %493 = sbr.rel (%p491) target = $region72
        $region71: #{tpu_custom_call.1} parent=63 // pred_region
          %s494 = sand.u32 %s31, 1
          %s495 = scalar_lea.sflag [#allocation6], %s494
          %s496 = sand.u32 %s67, 1
          %s497 = smul.addr %s496, 16
          %s498 = scalar_lea.vmem [#allocation5], %s497
          %500 = vsyncadd %s495, 0
          %s501 = smul.addr %s31, 2
          %s502 = smul.addr %s501, 8
          %s503 = scalar_lea.hbm %s1, %s502
          %s504 = sshll.u32 %s503, 4
          %s505 = int_to_ptr.hbm [resolvable:$true] %s504
          %s506 = sshll.u32 %s498, 4
          %s507 = int_to_ptr.vmem [resolvable:$true] %s506
          %512 = dma.hbm_to_vmem [thread:$0]  %s505, 256, %s507, %s495, 128, 128, 8
        $region72: #{tpu_custom_call.1} parent=63 // pred_fallthru
          _
      $region64: #{tpu_custom_call.1} parent=5 // pred_fallthru
        _
      %p513 = scmp.le.s32.totalorder 1, %s31
      %p514 = scmp.lt.s32.totalorder %s31, 3
      %p515 = pnand %p513, %p514
      %p516 = pneg %p515
      // Predicated region
      $region73: #{tpu_custom_call.1} parent=5 // pred_check
        _
      $region74: #{tpu_custom_call.1} parent=5 // pred_check_branch
        %518 = sbr.rel (%p515) target = $region76
      $region75: #{tpu_custom_call.1} parent=5 // pred_region
        %s519 = ssub.s32 %s31, 1
        %s520 = sand.u32 %s44, 1
        %s521 = scalar_lea.sflag [#allocation3], %s520
        %s522 = sand.u32 %s44, 1
        %s523 = smul.addr %s522, 16
        %s524 = scalar_lea.vmem [#allocation2], %s523
        // Predicated region
        $region77: #{tpu_custom_call.1} parent=75 // pred_check
          %p525 = pneg %p57
        $region78: #{tpu_custom_call.1} parent=75 // pred_check_branch
          %527 = sbr.rel (%p525) target = $region80
        $region79: #{tpu_custom_call.1} parent=75 // pred_region
          %529 = dma.done %s521, 256
        $region80: #{tpu_custom_call.1} parent=75 // pred_fallthru
          _
        %s530 = sand.u32 %s36, 1
        %s531 = scalar_lea.sflag [#allocation6], %s530
        %s532 = sand.u32 %s70, 1
        %s533 = smul.addr %s532, 16
        %s534 = scalar_lea.vmem [#allocation5], %s533
        // Predicated region
        $region81: #{tpu_custom_call.1} parent=75 // pred_check
          %p535 = pneg %p83
        $region82: #{tpu_custom_call.1} parent=75 // pred_check_branch
          %537 = sbr.rel (%p535) target = $region84
        $region83: #{tpu_custom_call.1} parent=75 // pred_region
          %539 = dma.done %s531, 256
        $region84: #{tpu_custom_call.1} parent=75 // pred_fallthru
          _
        // Predicated region
        $region85: #{tpu_custom_call.1} parent=75 // pred_check
          %p540 = pneg %p104
        $region86: #{tpu_custom_call.1} parent=75 // pred_check_branch
          %542 = sbr.rel (%p540) target = $region88
        $region87: #{tpu_custom_call.1} parent=75 // pred_region
          %544 = dma.done [#allocation6], 3072
        $region88: #{tpu_custom_call.1} parent=75 // pred_fallthru
          _
        // Predicated region
        $region89: #{tpu_custom_call.1} parent=75 // pred_check
          %p545 = pneg %p125
        $region90: #{tpu_custom_call.1} parent=75 // pred_check_branch
          %547 = sbr.rel (%p545) target = $region92
        $region91: #{tpu_custom_call.1} parent=75 // pred_region
          %549 = dma.done [#allocation9], 48
        $region92: #{tpu_custom_call.1} parent=75 // pred_fallthru
          _
        // Predicated region
        $region93: #{tpu_custom_call.1} parent=75 // pred_check
          %p550 = pneg %p146
        $region94: #{tpu_custom_call.1} parent=75 // pred_check_branch
          %552 = sbr.rel (%p550) target = $region96
        $region95: #{tpu_custom_call.1} parent=75 // pred_region
          %554 = dma.done [#allocation9], 1024
        $region96: #{tpu_custom_call.1} parent=75 // pred_fallthru
          _
        // Predicated region
        $region97: #{tpu_custom_call.1} parent=75 // pred_check
          %p555 = pneg %p230
        $region98: #{tpu_custom_call.1} parent=75 // pred_check_branch
          %557 = sbr.rel (%p555) target = $region100
        $region99: #{tpu_custom_call.1} parent=75 // pred_region
          %559 = dma.done [#allocation12], 2048
        $region100: #{tpu_custom_call.1} parent=75 // pred_fallthru
          _
        // Predicated region
        $region101: #{tpu_custom_call.1} parent=75 // pred_check
          %p560 = pneg %p272
        $region102: #{tpu_custom_call.1} parent=75 // pred_check_branch
          %562 = sbr.rel (%p560) target = $region104
        $region103: #{tpu_custom_call.1} parent=75 // pred_region
          %564 = dma.done [#allocation12], 2048
        $region104: #{tpu_custom_call.1} parent=75 // pred_fallthru
          _
        %s565 = sand.u32 %s44, 1
        %s566 = scalar_lea.sflag [#allocation3], %s565
        %s567 = sand.u32 %s44, 1
        %s568 = smul.addr %s567, 16
        %s569 = scalar_lea.vmem [#allocation2], %s568
        %p570 = pneg %p57
        %p571 = pneg %p54
        %s572 = sand.u32 %s36, 1
        %s573 = scalar_lea.sflag [#allocation6], %s572
        %s574 = sand.u32 %s70, 1
        %s575 = smul.addr %s574, 16
        %s576 = scalar_lea.vmem [#allocation5], %s575
        %p577 = pneg %p83
        %p578 = pneg %p80
        %p579 = pneg %p104
        %p580 = pneg %p101
        %p581 = pneg %p125
        %p582 = pneg %p122
        %p583 = pneg %p146
        %p584 = pneg %p143
        %p585 = pneg %p167
        %p586 = pneg %p164
        %p587 = pneg %p188
        %p588 = pneg %p185
        %p589 = pneg %p209
        %p590 = pneg %p206
        %p591 = pneg %p230
        %p592 = pneg %p227
        %p593 = pneg %p251
        %p594 = pneg %p248
        %p595 = pneg %p272
        %p596 = pneg %p269
        %p597 = pneg %p293
        %p598 = pneg %p290
        %p599 = pneg %p314
        %p600 = pneg %p311
        %p601 = pneg %p335
        %p602 = pneg %p332
        %p603 = pneg %p361
        %p604 = pneg %p358
        %s605 = sand.u32 %s348, 1
        %s606 = scalar_lea.sflag [#allocation4], %s605
        %s607 = sand.u32 %s348, 1
        %s608 = smul.addr %s607, 16
        %s609 = scalar_lea.vmem [#allocation14], %s608
        %v611 = vld [vmem:[%s524] sm:$0xff]
        %v612 = vld [vmem:[%s524 + $0x8] sm:$0xff]
        %v613 = vpack.c.bf16 %v612, %v611
        %v614 = vld [vmem:[#allocation7] sm:$0xff]
        %v615 = vld [vmem:[#allocation7 + $0x8] sm:$0xf]
        %v616 = vld [vmem:[#allocation7 + $0xc] sm:$0xff]
        %v617 = vld [vmem:[#allocation7 + $0x14] sm:$0xf]
        %v618 = vld [vmem:[#allocation7 + $0x18] sm:$0xff]
        %v619 = vld [vmem:[#allocation7 + $0x20] sm:$0xf]
        %v620 = vld [vmem:[#allocation7 + $0x24] sm:$0xff]
        %v621 = vld [vmem:[#allocation7 + $0x2c] sm:$0xf]
        %v622 = vld [vmem:[#allocation7 + $0x30] sm:$0xff]
        %v623 = vld [vmem:[#allocation7 + $0x38] sm:$0xf]
        %v624 = vld [vmem:[#allocation7 + $0x3c] sm:$0xff]
        %v625 = vld [vmem:[#allocation7 + $0x44] sm:$0xf]
        %v626 = vld [vmem:[#allocation7 + $0x48] sm:$0xff]
        %v627 = vld [vmem:[#allocation7 + $0x50] sm:$0xf]
        %v628 = vld [vmem:[#allocation7 + $0x54] sm:$0xff]
        %v629 = vld [vmem:[#allocation7 + $0x5c] sm:$0xf]
        %v630 = vld [vmem:[#allocation7 + $0x60] sm:$0xff]
        %v631 = vld [vmem:[#allocation7 + $0x68] sm:$0xf]
        %v632 = vld [vmem:[#allocation7 + $0x6c] sm:$0xff]
        %v633 = vld [vmem:[#allocation7 + $0x74] sm:$0xf]
        %v634 = vld [vmem:[#allocation7 + $0x78] sm:$0xff]
        %v635 = vld [vmem:[#allocation7 + $0x80] sm:$0xf]
        %v636 = vld [vmem:[#allocation7 + $0x84] sm:$0xff]
        %v637 = vld [vmem:[#allocation7 + $0x8c] sm:$0xf]
        %v638 = vld [vmem:[#allocation7 + $0x90] sm:$0xff]
        %v639 = vld [vmem:[#allocation7 + $0x98] sm:$0xf]
        %v640 = vld [vmem:[#allocation7 + $0x9c] sm:$0xff]
        %v641 = vld [vmem:[#allocation7 + $0xa4] sm:$0xf]
        %v642 = vld [vmem:[#allocation7 + $0xa8] sm:$0xff]
        %v643 = vld [vmem:[#allocation7 + $0xb0] sm:$0xf]
        %v644 = vld [vmem:[#allocation7 + $0xb4] sm:$0xff]
        %v645 = vld [vmem:[#allocation7 + $0xbc] sm:$0xf]
        %v646 = vld [vmem:[#allocation8] sm:$0x7]
        %v648 = vperm.slane %v646, 0
        %v649 = vperm.slane %v646, 1
        %v650 = vperm.slane %v646, 2
        %v686 = vunpack.c.l.b16 %v614
        %v687 = vunpack.c.h.b16 %v614
        %v688 = vunpack.c.l.b16 %v615
        %v689 = vunpack.c.l.b16 %v616
        %v690 = vunpack.c.h.b16 %v616
        %v691 = vunpack.c.l.b16 %v617
        %v692 = vunpack.c.l.b16 %v618
        %v693 = vunpack.c.h.b16 %v618
        %v694 = vunpack.c.l.b16 %v619
        %v695 = vunpack.c.l.b16 %v620
        %v696 = vunpack.c.h.b16 %v620
        %v697 = vunpack.c.l.b16 %v621
        %v698 = vunpack.c.l.b16 %v622
        %v699 = vunpack.c.h.b16 %v622
        %v700 = vunpack.c.l.b16 %v623
        %v701 = vunpack.c.l.b16 %v624
        %v702 = vunpack.c.h.b16 %v624
        %v703 = vunpack.c.l.b16 %v625
        %v704 = vunpack.c.l.b16 %v626
        %v705 = vunpack.c.h.b16 %v626
        %v706 = vunpack.c.l.b16 %v627
        %v707 = vunpack.c.l.b16 %v628
        %v708 = vunpack.c.h.b16 %v628
        %v709 = vunpack.c.l.b16 %v629
        %v710 = vunpack.c.l.b16 %v630
        %v711 = vunpack.c.h.b16 %v630
        %v712 = vunpack.c.l.b16 %v631
        %v713 = vunpack.c.l.b16 %v632
        %v714 = vunpack.c.h.b16 %v632
        %v715 = vunpack.c.l.b16 %v633
        %v716 = vunpack.c.l.b16 %v634
        %v717 = vunpack.c.h.b16 %v634
        %v718 = vunpack.c.l.b16 %v635
        %v719 = vunpack.c.l.b16 %v636
        %v720 = vunpack.c.h.b16 %v636
        %v721 = vunpack.c.l.b16 %v637
        %v722 = vunpack.c.l.b16 %v638
        %v723 = vunpack.c.h.b16 %v638
        %v724 = vunpack.c.l.b16 %v639
        %v725 = vunpack.c.l.b16 %v640
        %v726 = vunpack.c.h.b16 %v640
        %v727 = vunpack.c.l.b16 %v641
        %v728 = vunpack.c.l.b16 %v642
        %v729 = vunpack.c.h.b16 %v642
        %v730 = vunpack.c.l.b16 %v643
        %v731 = vunpack.c.l.b16 %v644
        %v732 = vunpack.c.h.b16 %v644
        %v733 = vunpack.c.l.b16 %v645
        %v734 = vpack.c.b16 %v689, %v686
        %v735 = vpack.c.b16 %v690, %v687
        %v736 = vpack.c.b16 %v691, %v688
        %v737 = vpack.c.b16 %v695, %v692
        %v738 = vpack.c.b16 %v696, %v693
        %v739 = vpack.c.b16 %v697, %v694
        %v740 = vpack.c.b16 %v701, %v698
        %v741 = vpack.c.b16 %v702, %v699
        %v742 = vpack.c.b16 %v703, %v700
        %v743 = vpack.c.b16 %v707, %v704
        %v744 = vpack.c.b16 %v708, %v705
        %v745 = vpack.c.b16 %v709, %v706
        %v746 = vpack.c.b16 %v713, %v710
        %v747 = vpack.c.b16 %v714, %v711
        %v748 = vpack.c.b16 %v715, %v712
        %v749 = vpack.c.b16 %v719, %v716
        %v750 = vpack.c.b16 %v720, %v717
        %v751 = vpack.c.b16 %v721, %v718
        %v752 = vpack.c.b16 %v725, %v722
        %v753 = vpack.c.b16 %v726, %v723
        %v754 = vpack.c.b16 %v727, %v724
        %v755 = vpack.c.b16 %v731, %v728
        %v756 = vpack.c.b16 %v732, %v729
        %v757 = vpack.c.b16 %v733, %v730
        %782 = vmatpush.bf16.msra.mxu0 %v755
        %783 = vmatpush.bf16.msra.mxu0 %v752
        %784 = vmatpush.bf16.msra.mxu0 %v749
        %785 = vmatpush.bf16.msra.mxu0 %v746
        %786 = vmatpush.bf16.msra.mxu0 %v743
        %787 = vmatpush.bf16.msra.mxu0 %v740
        %788 = vmatpush.bf16.msra.mxu0 %v737
        %789 = vmatpush.bf16.msra.mxu0 %v734
        %790 = vmatmul.bf16.gmra.mxu0 %v613
        %v791 = vpop.f32.mrf.mxu0
        %v792 = vadd.f32 %v648, %v791
        %v793 = vpop.f32.mrf.mxu0
        %v794 = vadd.f32 %v648, %v793
        %795 = vdwg.mxu0
        %796 = vmatpush.bf16.msra.mxu0 %v756
        %797 = vmatpush.bf16.msra.mxu0 %v753
        %798 = vmatpush.bf16.msra.mxu0 %v750
        %799 = vmatpush.bf16.msra.mxu0 %v747
        %800 = vmatpush.bf16.msra.mxu0 %v744
        %801 = vmatpush.bf16.msra.mxu0 %v741
        %802 = vmatpush.bf16.msra.mxu0 %v738
        %803 = vmatpush.bf16.msra.mxu0 %v735
        %804 = vmatmul.bf16.gmra.mxu0 %v613
        %v805 = vpop.f32.mrf.mxu0
        %v806 = vadd.f32 %v649, %v805
        %v807 = vpop.f32.mrf.mxu0
        %v808 = vadd.f32 %v649, %v807
        %809 = vdwg.mxu0
        %810 = vmatpush.bf16.msra.mxu0 %v757
        %811 = vmatpush.bf16.msra.mxu0 %v754
        %812 = vmatpush.bf16.msra.mxu0 %v751
        %813 = vmatpush.bf16.msra.mxu0 %v748
        %814 = vmatpush.bf16.msra.mxu0 %v745
        %815 = vmatpush.bf16.msra.mxu0 %v742
        %816 = vmatpush.bf16.msra.mxu0 %v739
        %817 = vmatpush.bf16.msra.mxu0 %v736
        %818 = vmatmul.bf16.gmra.mxu0 %v613
        %v819 = vpop.f32.mrf.mxu0
        %v820 = vadd.f32 %v650, %v819
        %v821 = vpop.f32.mrf.mxu0
        %v822 = vadd.f32 %v650, %v821
        %823 = vdwg.mxu0
        %v824 = vpack.c.bf16 %v792, %v792
        %v825 = vpack.c.bf16 %v794, %v794
        %v826 = vpack.c.bf16 %v806, %v806
        %v827 = vpack.c.bf16 %v808, %v808
        %v828 = vpack.c.bf16 %v820, %v820
        %v829 = vpack.c.bf16 %v822, %v822
        %v830 = vld [vmem:[%s534] sm:$0xff]
        %v831 = vld [vmem:[%s534 + $0x8] sm:$0xff]
        %vm832 = vcmp.gt.f32.partialorder %v830, 0.5
        %vm833 = vcmp.gt.f32.partialorder %v831, 0.5
        %v836 = vunpack.c.l.b16 %v824
        %v837 = vunpack.c.l.b16 %v825
        %v838 = vpack.c.b16 %v837, %v836
        %v841 = vunpack.c.l.b16 %v826
        %v842 = vunpack.c.l.b16 %v827
        %v843 = vpack.c.b16 %v842, %v841
        %vm844 = vcmask 261120
        %v846 = vsel %vm844, %v838, 0
        %v849 = vsel %vm844, %v843, 0
        %851 = vmatpush.bf16.xpose.msra.mxu0 0
        %852 = vmatpush.bf16.xpose.msra.mxu0 0
        %853 = vmatpush.bf16.xpose.msra.mxu0 0
        %854 = vmatpush.bf16.xpose.msra.mxu0 0
        %855 = vmatpush.bf16.xpose.msra.mxu0 0
        %856 = vmatpush.bf16.xpose.msra.mxu0 0
        %857 = vmatpush.bf16.xpose.msra.mxu0 0
        %858 = vmatpush.bf16.xpose.msra.mxu0 %v849
        %859 = vmatmul.bf16.gmra.mxu0 %v846
        %v860 = vpop.f32.mrf.mxu0
        %v861 = vadd.f32 0.0, %v860
        %v862 = vpop.f32.mrf.mxu0
        %v863 = vadd.f32 0.0, %v862
        %864 = vdwg.mxu0
        %v865 = vsel %vm832, -1e+09, %v861
        %v866 = vsel %vm833, -1e+09, %v863
        %vm867 = vcmask 130048
        %v868 = vsel %vm867, %v865, -inf
        %869 = vmax.xlane.f32.xlu0 %v868
        %v870 = vpop.xlane.xlu0 %869
        %v871 = vsel %vm867, %v866, -inf
        %872 = vmax.xlane.f32.xlu0 %v871
        %v873 = vpop.xlane.xlu0 %872
        %v874 = vsub.f32 %v865, %v870
        %v875 = vsub.f32 %v866, %v873
        %v876 = vmul.f32 %v874, 1.442695
        %v877 = vpow.pop %v876
        %v878 = vmul.f32 %v875, 1.442695
        %v879 = vpow.pop %v878
        %v880 = vsel %vm867, %v877, 0.0
        %881 = vadd.xlane.f32.xlu0 %v880
        %v882 = vpop.xlane.xlu0 %881
        %v883 = vsel %vm867, %v879, 0.0
        %884 = vadd.xlane.f32.xlu0 %v883
        %v885 = vpop.xlane.xlu0 %884
        %v886 = vrcp.pop %v882
        %v887 = vmul.f32 %v882, %v886
        %v888 = vsub.f32 1.0, %v887
        %v889 = vmul.f32 %v886, %v888
        %v890 = vadd.f32 %v886, %v889
        %vm891 = vweird.f32 %v882
        %vm892 = vweird.f32 %v886
        %vm893 = vmor %vm891, %vm892
        %v894 = vsel %vm893, %v886, %v890
        %v895 = vand.u32 2147483647, %v882
        %vm896 = vcmp.eq.f32.partialorder %v895, 8.507059e+37
        %v897 = vand.u32 %v882, 2147483648
        %v898 = vor.u32 1.1754944e-38, %v897
        %v899 = vsel %vm896, %v898, %v894
        %v900 = vmul.f32 1.0, %v899
        %v901 = vrcp.pop %v885
        %v902 = vmul.f32 %v885, %v901
        %v903 = vsub.f32 1.0, %v902
        %v904 = vmul.f32 %v901, %v903
        %v905 = vadd.f32 %v901, %v904
        %vm906 = vweird.f32 %v885
        %vm907 = vweird.f32 %v901
        %vm908 = vmor %vm906, %vm907
        %v909 = vsel %vm908, %v901, %v905
        %v910 = vand.u32 2147483647, %v885
        %vm911 = vcmp.eq.f32.partialorder %v910, 8.507059e+37
        %v912 = vand.u32 %v885, 2147483648
        %v913 = vor.u32 1.1754944e-38, %v912
        %v914 = vsel %vm911, %v913, %v909
        %v915 = vmul.f32 1.0, %v914
        %v916 = vmul.f32 %v877, %v900
        %v917 = vmul.f32 %v879, %v915
        %v918 = vpack.c.bf16 %v917, %v916
        %v921 = vunpack.c.l.b16 %v828
        %v922 = vunpack.c.l.b16 %v829
        %v923 = vpack.c.b16 %v922, %v921
        %v926 = vsel %vm867, %v918, 0
        %928 = vmatpush.bf16.msra.mxu0 0
        %929 = vmatpush.bf16.msra.mxu0 0
        %930 = vmatpush.bf16.msra.mxu0 0
        %931 = vmatpush.bf16.msra.mxu0 0
        %932 = vmatpush.bf16.msra.mxu0 0
        %933 = vmatpush.bf16.msra.mxu0 0
        %934 = vmatpush.bf16.msra.mxu0 0
        %935 = vmatpush.bf16.msra.mxu0 %v923
        %936 = vmatmul.bf16.gmra.mxu0 %v926
        %v937 = vpop.f32.mrf.mxu0
        %v938 = vadd.f32 0.0, %v937
        %v939 = vpop.f32.mrf.mxu0
        %v940 = vadd.f32 0.0, %v939
        %941 = vdwg.mxu0
        %942 = vrot.lane.b32.xlu0 %v838, 96
        %v943 = vpop.permute.xlu0 %942
        %944 = vrot.lane.b32.xlu0 %v843, 96
        %v945 = vpop.permute.xlu0 %944
        %v947 = vsel %vm844, %v943, 0
        %v950 = vsel %vm844, %v945, 0
        %952 = vmatpush.bf16.xpose.msra.mxu0 0
        %953 = vmatpush.bf16.xpose.msra.mxu0 0
        %954 = vmatpush.bf16.xpose.msra.mxu0 0
        %955 = vmatpush.bf16.xpose.msra.mxu0 0
        %956 = vmatpush.bf16.xpose.msra.mxu0 0
        %957 = vmatpush.bf16.xpose.msra.mxu0 0
        %958 = vmatpush.bf16.xpose.msra.mxu0 0
        %959 = vmatpush.bf16.xpose.msra.mxu0 %v950
        %960 = vmatmul.bf16.gmra.mxu0 %v947
        %v961 = vpop.f32.mrf.mxu0
        %v962 = vadd.f32 0.0, %v961
        %v963 = vpop.f32.mrf.mxu0
        %v964 = vadd.f32 0.0, %v963
        %965 = vdwg.mxu0
        %v966 = vsel %vm832, -1e+09, %v962
        %v967 = vsel %vm833, -1e+09, %v964
        %v968 = vsel %vm867, %v966, -inf
        %969 = vmax.xlane.f32.xlu0 %v968
        %v970 = vpop.xlane.xlu0 %969
        %v971 = vsel %vm867, %v967, -inf
        %972 = vmax.xlane.f32.xlu0 %v971
        %v973 = vpop.xlane.xlu0 %972
        %v974 = vsub.f32 %v966, %v970
        %v975 = vsub.f32 %v967, %v973
        %v976 = vmul.f32 %v974, 1.442695
        %v977 = vpow.pop %v976
        %v978 = vmul.f32 %v975, 1.442695
        %v979 = vpow.pop %v978
        %v980 = vsel %vm867, %v977, 0.0
        %981 = vadd.xlane.f32.xlu0 %v980
        %v982 = vpop.xlane.xlu0 %981
        %v983 = vsel %vm867, %v979, 0.0
        %984 = vadd.xlane.f32.xlu0 %v983
        %v985 = vpop.xlane.xlu0 %984
        %v986 = vrcp.pop %v982
        %v987 = vmul.f32 %v982, %v986
        %v988 = vsub.f32 1.0, %v987
        %v989 = vmul.f32 %v986, %v988
        %v990 = vadd.f32 %v986, %v989
        %vm991 = vweird.f32 %v982
        %vm992 = vweird.f32 %v986
        %vm993 = vmor %vm991, %vm992
        %v994 = vsel %vm993, %v986, %v990
        %v995 = vand.u32 2147483647, %v982
        %vm996 = vcmp.eq.f32.partialorder %v995, 8.507059e+37
        %v997 = vand.u32 %v982, 2147483648
        %v998 = vor.u32 1.1754944e-38, %v997
        %v999 = vsel %vm996, %v998, %v994
        %v1000 = vmul.f32 1.0, %v999
        %v1001 = vrcp.pop %v985
        %v1002 = vmul.f32 %v985, %v1001
        %v1003 = vsub.f32 1.0, %v1002
        %v1004 = vmul.f32 %v1001, %v1003
        %v1005 = vadd.f32 %v1001, %v1004
        %vm1006 = vweird.f32 %v985
        %vm1007 = vweird.f32 %v1001
        %vm1008 = vmor %vm1006, %vm1007
        %v1009 = vsel %vm1008, %v1001, %v1005
        %v1010 = vand.u32 2147483647, %v985
        %vm1011 = vcmp.eq.f32.partialorder %v1010, 8.507059e+37
        %v1012 = vand.u32 %v985, 2147483648
        %v1013 = vor.u32 1.1754944e-38, %v1012
        %v1014 = vsel %vm1011, %v1013, %v1009
        %v1015 = vmul.f32 1.0, %v1014
        %v1016 = vmul.f32 %v977, %v1000
        %v1017 = vmul.f32 %v979, %v1015
        %v1018 = vpack.c.bf16 %v1017, %v1016
        %1019 = vrot.lane.b32.xlu0 %v923, 96
        %v1020 = vpop.permute.xlu0 %1019
        %v1023 = vsel %vm867, %v1018, 0
        %1025 = vmatpush.bf16.msra.mxu0 0
        %1026 = vmatpush.bf16.msra.mxu0 0
        %1027 = vmatpush.bf16.msra.mxu0 0
        %1028 = vmatpush.bf16.msra.mxu0 0
        %1029 = vmatpush.bf16.msra.mxu0 0
        %1030 = vmatpush.bf16.msra.mxu0 0
        %1031 = vmatpush.bf16.msra.mxu0 0
        %1032 = vmatpush.bf16.msra.mxu0 %v1020
        %1033 = vmatmul.bf16.gmra.mxu0 %v1023
        %v1034 = vpop.f32.mrf.mxu0
        %v1035 = vadd.f32 0.0, %v1034
        %v1036 = vpop.f32.mrf.mxu0
        %v1037 = vadd.f32 0.0, %v1036
        %1038 = vdwg.mxu0
        %1039 = vrot.lane.b32.xlu0 %v838, 64
        %v1040 = vpop.permute.xlu0 %1039
        %1041 = vrot.lane.b32.xlu0 %v843, 64
        %v1042 = vpop.permute.xlu0 %1041
        %v1044 = vsel %vm844, %v1040, 0
        %v1047 = vsel %vm844, %v1042, 0
        %1049 = vmatpush.bf16.xpose.msra.mxu0 0
        %1050 = vmatpush.bf16.xpose.msra.mxu0 0
        %1051 = vmatpush.bf16.xpose.msra.mxu0 0
        %1052 = vmatpush.bf16.xpose.msra.mxu0 0
        %1053 = vmatpush.bf16.xpose.msra.mxu0 0
        %1054 = vmatpush.bf16.xpose.msra.mxu0 0
        %1055 = vmatpush.bf16.xpose.msra.mxu0 0
        %1056 = vmatpush.bf16.xpose.msra.mxu0 %v1047
        %1057 = vmatmul.bf16.gmra.mxu0 %v1044
        %v1058 = vpop.f32.mrf.mxu0
        %v1059 = vadd.f32 0.0, %v1058
        %v1060 = vpop.f32.mrf.mxu0
        %v1061 = vadd.f32 0.0, %v1060
        %1062 = vdwg.mxu0
        %v1063 = vsel %vm832, -1e+09, %v1059
        %v1064 = vsel %vm833, -1e+09, %v1061
        %v1065 = vsel %vm867, %v1063, -inf
        %1066 = vmax.xlane.f32.xlu0 %v1065
        %v1067 = vpop.xlane.xlu0 %1066
        %v1068 = vsel %vm867, %v1064, -inf
        %1069 = vmax.xlane.f32.xlu0 %v1068
        %v1070 = vpop.xlane.xlu0 %1069
        %v1071 = vsub.f32 %v1063, %v1067
        %v1072 = vsub.f32 %v1064, %v1070
        %v1073 = vmul.f32 %v1071, 1.442695
        %v1074 = vpow.pop %v1073
        %v1075 = vmul.f32 %v1072, 1.442695
        %v1076 = vpow.pop %v1075
        %v1077 = vsel %vm867, %v1074, 0.0
        %1078 = vadd.xlane.f32.xlu0 %v1077
        %v1079 = vpop.xlane.xlu0 %1078
        %v1080 = vsel %vm867, %v1076, 0.0
        %1081 = vadd.xlane.f32.xlu0 %v1080
        %v1082 = vpop.xlane.xlu0 %1081
        %v1083 = vrcp.pop %v1079
        %v1084 = vmul.f32 %v1079, %v1083
        %v1085 = vsub.f32 1.0, %v1084
        %v1086 = vmul.f32 %v1083, %v1085
        %v1087 = vadd.f32 %v1083, %v1086
        %vm1088 = vweird.f32 %v1079
        %vm1089 = vweird.f32 %v1083
        %vm1090 = vmor %vm1088, %vm1089
        %v1091 = vsel %vm1090, %v1083, %v1087
        %v1092 = vand.u32 2147483647, %v1079
        %vm1093 = vcmp.eq.f32.partialorder %v1092, 8.507059e+37
        %v1094 = vand.u32 %v1079, 2147483648
        %v1095 = vor.u32 1.1754944e-38, %v1094
        %v1096 = vsel %vm1093, %v1095, %v1091
        %v1097 = vmul.f32 1.0, %v1096
        %v1098 = vrcp.pop %v1082
        %v1099 = vmul.f32 %v1082, %v1098
        %v1100 = vsub.f32 1.0, %v1099
        %v1101 = vmul.f32 %v1098, %v1100
        %v1102 = vadd.f32 %v1098, %v1101
        %vm1103 = vweird.f32 %v1082
        %vm1104 = vweird.f32 %v1098
        %vm1105 = vmor %vm1103, %vm1104
        %v1106 = vsel %vm1105, %v1098, %v1102
        %v1107 = vand.u32 2147483647, %v1082
        %vm1108 = vcmp.eq.f32.partialorder %v1107, 8.507059e+37
        %v1109 = vand.u32 %v1082, 2147483648
        %v1110 = vor.u32 1.1754944e-38, %v1109
        %v1111 = vsel %vm1108, %v1110, %v1106
        %v1112 = vmul.f32 1.0, %v1111
        %v1113 = vmul.f32 %v1074, %v1097
        %v1114 = vmul.f32 %v1076, %v1112
        %v1115 = vpack.c.bf16 %v1114, %v1113
        %1116 = vrot.lane.b32.xlu0 %v923, 64
        %v1117 = vpop.permute.xlu0 %1116
        %v1120 = vsel %vm867, %v1115, 0
        %1122 = vmatpush.bf16.msra.mxu0 0
        %1123 = vmatpush.bf16.msra.mxu0 0
        %1124 = vmatpush.bf16.msra.mxu0 0
        %1125 = vmatpush.bf16.msra.mxu0 0
        %1126 = vmatpush.bf16.msra.mxu0 0
        %1127 = vmatpush.bf16.msra.mxu0 0
        %1128 = vmatpush.bf16.msra.mxu0 0
        %1129 = vmatpush.bf16.msra.mxu0 %v1117
        %1130 = vmatmul.bf16.gmra.mxu0 %v1120
        %v1131 = vpop.f32.mrf.mxu0
        %v1132 = vadd.f32 0.0, %v1131
        %v1133 = vpop.f32.mrf.mxu0
        %v1134 = vadd.f32 0.0, %v1133
        %1135 = vdwg.mxu0
        %1136 = vrot.lane.b32.xlu0 %v838, 32
        %v1137 = vpop.permute.xlu0 %1136
        %1138 = vrot.lane.b32.xlu0 %v843, 32
        %v1139 = vpop.permute.xlu0 %1138
        %v1141 = vsel %vm844, %v1137, 0
        %v1144 = vsel %vm844, %v1139, 0
        %1146 = vmatpush.bf16.xpose.msra.mxu0 0
        %1147 = vmatpush.bf16.xpose.msra.mxu0 0
        %1148 = vmatpush.bf16.xpose.msra.mxu0 0
        %1149 = vmatpush.bf16.xpose.msra.mxu0 0
        %1150 = vmatpush.bf16.xpose.msra.mxu0 0
        %1151 = vmatpush.bf16.xpose.msra.mxu0 0
        %1152 = vmatpush.bf16.xpose.msra.mxu0 0
        %1153 = vmatpush.bf16.xpose.msra.mxu0 %v1144
        %1154 = vmatmul.bf16.gmra.mxu0 %v1141
        %v1155 = vpop.f32.mrf.mxu0
        %v1156 = vadd.f32 0.0, %v1155
        %v1157 = vpop.f32.mrf.mxu0
        %v1158 = vadd.f32 0.0, %v1157
        %1159 = vdwg.mxu0
        %v1160 = vsel %vm832, -1e+09, %v1156
        %v1161 = vsel %vm833, -1e+09, %v1158
        %v1162 = vsel %vm867, %v1160, -inf
        %1163 = vmax.xlane.f32.xlu0 %v1162
        %v1164 = vpop.xlane.xlu0 %1163
        %v1165 = vsel %vm867, %v1161, -inf
        %1166 = vmax.xlane.f32.xlu0 %v1165
        %v1167 = vpop.xlane.xlu0 %1166
        %v1168 = vsub.f32 %v1160, %v1164
        %v1169 = vsub.f32 %v1161, %v1167
        %v1170 = vmul.f32 %v1168, 1.442695
        %v1171 = vpow.pop %v1170
        %v1172 = vmul.f32 %v1169, 1.442695
        %v1173 = vpow.pop %v1172
        %v1174 = vsel %vm867, %v1171, 0.0
        %1175 = vadd.xlane.f32.xlu0 %v1174
        %v1176 = vpop.xlane.xlu0 %1175
        %v1177 = vsel %vm867, %v1173, 0.0
        %1178 = vadd.xlane.f32.xlu0 %v1177
        %v1179 = vpop.xlane.xlu0 %1178
        %v1180 = vrcp.pop %v1176
        %v1181 = vmul.f32 %v1176, %v1180
        %v1182 = vsub.f32 1.0, %v1181
        %v1183 = vmul.f32 %v1180, %v1182
        %v1184 = vadd.f32 %v1180, %v1183
        %vm1185 = vweird.f32 %v1176
        %vm1186 = vweird.f32 %v1180
        %vm1187 = vmor %vm1185, %vm1186
        %v1188 = vsel %vm1187, %v1180, %v1184
        %v1189 = vand.u32 2147483647, %v1176
        %vm1190 = vcmp.eq.f32.partialorder %v1189, 8.507059e+37
        %v1191 = vand.u32 %v1176, 2147483648
        %v1192 = vor.u32 1.1754944e-38, %v1191
        %v1193 = vsel %vm1190, %v1192, %v1188
        %v1194 = vmul.f32 1.0, %v1193
        %v1195 = vrcp.pop %v1179
        %v1196 = vmul.f32 %v1179, %v1195
        %v1197 = vsub.f32 1.0, %v1196
        %v1198 = vmul.f32 %v1195, %v1197
        %v1199 = vadd.f32 %v1195, %v1198
        %vm1200 = vweird.f32 %v1179
        %vm1201 = vweird.f32 %v1195
        %vm1202 = vmor %vm1200, %vm1201
        %v1203 = vsel %vm1202, %v1195, %v1199
        %v1204 = vand.u32 2147483647, %v1179
        %vm1205 = vcmp.eq.f32.partialorder %v1204, 8.507059e+37
        %v1206 = vand.u32 %v1179, 2147483648
        %v1207 = vor.u32 1.1754944e-38, %v1206
        %v1208 = vsel %vm1205, %v1207, %v1203
        %v1209 = vmul.f32 1.0, %v1208
        %v1210 = vmul.f32 %v1171, %v1194
        %v1211 = vmul.f32 %v1173, %v1209
        %v1212 = vpack.c.bf16 %v1211, %v1210
        %1213 = vrot.lane.b32.xlu0 %v923, 32
        %v1214 = vpop.permute.xlu0 %1213
        %v1217 = vsel %vm867, %v1212, 0
        %1219 = vmatpush.bf16.msra.mxu0 0
        %1220 = vmatpush.bf16.msra.mxu0 0
        %1221 = vmatpush.bf16.msra.mxu0 0
        %1222 = vmatpush.bf16.msra.mxu0 0
        %1223 = vmatpush.bf16.msra.mxu0 0
        %1224 = vmatpush.bf16.msra.mxu0 0
        %1225 = vmatpush.bf16.msra.mxu0 0
        %1226 = vmatpush.bf16.msra.mxu0 %v1214
        %1227 = vmatmul.bf16.gmra.mxu0 %v1217
        %v1228 = vpop.f32.mrf.mxu0
        %v1229 = vadd.f32 0.0, %v1228
        %v1230 = vpop.f32.mrf.mxu0
        %v1231 = vadd.f32 0.0, %v1230
        %1232 = vdwg.mxu0
        %1235 = vrot.lane.b32.xlu0 %v1035, 32
        %v1236 = vpop.permute.xlu0 %1235
        %1237 = vrot.lane.b32.xlu0 %v1037, 32
        %v1238 = vpop.permute.xlu0 %1237
        %1243 = vrot.lane.b32.xlu0 %v1132, 64
        %v1244 = vpop.permute.xlu0 %1243
        %1245 = vrot.lane.b32.xlu0 %v1134, 64
        %v1246 = vpop.permute.xlu0 %1245
        %1251 = vrot.lane.b32.xlu0 %v1229, 96
        %v1252 = vpop.permute.xlu0 %1251
        %1253 = vrot.lane.b32.xlu0 %v1231, 96
        %v1254 = vpop.permute.xlu0 %1253
        %v1257 = vsel %vm844, %v938, %v1236
        %v1258 = vsel %vm844, %v940, %v1238
        %vm1259 = vcmask 523264
        %v1260 = vsel %vm1259, %v1257, %v1244
        %v1261 = vsel %vm1259, %v1258, %v1246
        %vm1262 = vcmask 785408
        %v1263 = vsel %vm1262, %v1260, %v1252
        %v1264 = vsel %vm1262, %v1261, %v1254
        %v1265 = vpack.c.bf16 %v1264, %v1263
        %v1266 = vld [vmem:[#allocation10] sm:$0xf]
        %v1267 = vld [vmem:[#allocation10 + $0x4] sm:$0xf]
        %v1268 = vld [vmem:[#allocation10 + $0x8] sm:$0xf]
        %v1269 = vld [vmem:[#allocation10 + $0xc] sm:$0xf]
        %v1270 = vld [vmem:[#allocation10 + $0x10] sm:$0xf]
        %v1271 = vld [vmem:[#allocation10 + $0x14] sm:$0xf]
        %v1272 = vld [vmem:[#allocation10 + $0x18] sm:$0xf]
        %v1273 = vld [vmem:[#allocation10 + $0x1c] sm:$0xf]
        %v1274 = vld [vmem:[#allocation10 + $0x20] sm:$0xf]
        %v1275 = vld [vmem:[#allocation10 + $0x24] sm:$0xf]
        %v1276 = vld [vmem:[#allocation10 + $0x28] sm:$0xf]
        %v1277 = vld [vmem:[#allocation10 + $0x2c] sm:$0xf]
        %v1278 = vld [vmem:[#allocation10 + $0x30] sm:$0xf]
        %v1279 = vld [vmem:[#allocation10 + $0x34] sm:$0xf]
        %v1280 = vld [vmem:[#allocation10 + $0x38] sm:$0xf]
        %v1281 = vld [vmem:[#allocation10 + $0x3c] sm:$0xf]
        %v1282 = vld [vmem:[%s5] sm:$0x1]
        %v1284 = vperm.slane %v1282, 0
        %v1302 = vunpack.c.l.b16 %v1266
        %v1303 = vunpack.c.l.b16 %v1267
        %v1304 = vunpack.c.l.b16 %v1268
        %v1305 = vunpack.c.l.b16 %v1269
        %v1306 = vunpack.c.l.b16 %v1270
        %v1307 = vunpack.c.l.b16 %v1271
        %v1308 = vunpack.c.l.b16 %v1272
        %v1309 = vunpack.c.l.b16 %v1273
        %v1310 = vunpack.c.l.b16 %v1274
        %v1311 = vunpack.c.l.b16 %v1275
        %v1312 = vunpack.c.l.b16 %v1276
        %v1313 = vunpack.c.l.b16 %v1277
        %v1314 = vunpack.c.l.b16 %v1278
        %v1315 = vunpack.c.l.b16 %v1279
        %v1316 = vunpack.c.l.b16 %v1280
        %v1317 = vunpack.c.l.b16 %v1281
        %v1318 = vpack.c.b16 %v1303, %v1302
        %v1319 = vpack.c.b16 %v1305, %v1304
        %v1320 = vpack.c.b16 %v1307, %v1306
        %v1321 = vpack.c.b16 %v1309, %v1308
        %v1322 = vpack.c.b16 %v1311, %v1310
        %v1323 = vpack.c.b16 %v1313, %v1312
        %v1324 = vpack.c.b16 %v1315, %v1314
        %v1325 = vpack.c.b16 %v1317, %v1316
        %1334 = vmatpush.bf16.msra.mxu0 %v1325
        %1335 = vmatpush.bf16.msra.mxu0 %v1324
        %1336 = vmatpush.bf16.msra.mxu0 %v1323
        %1337 = vmatpush.bf16.msra.mxu0 %v1322
        %1338 = vmatpush.bf16.msra.mxu0 %v1321
        %1339 = vmatpush.bf16.msra.mxu0 %v1320
        %1340 = vmatpush.bf16.msra.mxu0 %v1319
        %1341 = vmatpush.bf16.msra.mxu0 %v1318
        %1342 = vmatmul.bf16.gmra.mxu0 %v1265
        %v1343 = vpop.f32.mrf.mxu0
        %v1344 = vadd.f32 %v1284, %v1343
        %v1345 = vpop.f32.mrf.mxu0
        %v1346 = vadd.f32 %v1284, %v1345
        %1347 = vdwg.mxu0
        %v1348 = vadd.f32 %v1344, %v611
        %v1349 = vadd.f32 %v1346, %v612
        %v1350 = vld [vmem:[%s6] sm:$0x1]
        %v1351 = vld [vmem:[%s7] sm:$0x1]
        %1352 = vadd.xlane.f32.xlu0 %v1348
        %v1353 = vpop.xlane.xlu0 %1352
        %1354 = vadd.xlane.f32.xlu0 %v1349
        %v1355 = vpop.xlane.xlu0 %1354
        %v1356 = vrcp.pop 128.0
        %v1357 = vmul.f32 128.0, %v1356
        %v1358 = vsub.f32 1.0, %v1357
        %v1359 = vmul.f32 %v1356, %v1358
        %v1360 = vadd.f32 %v1356, %v1359
        %vm1361 = vweird.f32 %v1356
        %v1362 = vsel %vm1361, %v1356, %v1360
        %v1363 = vmul.f32 %v1353, %v1362
        %v1364 = vmul.f32 %v1355, %v1362
        %v1365 = vsub.f32 %v1348, %v1363
        %v1366 = vsub.f32 %v1349, %v1364
        %v1367 = vmul.f32 %v1365, %v1365
        %v1368 = vmul.f32 %v1366, %v1366
        %1369 = vadd.xlane.f32.xlu0 %v1367
        %v1370 = vpop.xlane.xlu0 %1369
        %1371 = vadd.xlane.f32.xlu0 %v1368
        %v1372 = vpop.xlane.xlu0 %1371
        %v1373 = vmul.f32 %v1370, %v1362
        %v1374 = vmul.f32 %v1372, %v1362
        %v1375 = vadd.f32 %v1373, 1e-05
        %v1376 = vadd.f32 %v1374, 1e-05
        %v1377 = vrsqrt.pop %v1375
        %v1378 = vmul.f32 %v1377, %v1375
        %v1379 = vmul.f32 %v1378, %v1377
        %v1380 = vmul.f32 0.5, %v1379
        %v1381 = vsub.f32 1.5, %v1380
        %v1382 = vmul.f32 %v1377, %v1381
        %vm1383 = vweird.f32 %v1375
        %vm1384 = vweird.f32 %v1377
        %vm1385 = vmor %vm1383, %vm1384
        %v1386 = vsel %vm1385, %v1377, %v1382
        %v1387 = vrsqrt.pop %v1376
        %v1388 = vmul.f32 %v1387, %v1376
        %v1389 = vmul.f32 %v1388, %v1387
        %v1390 = vmul.f32 0.5, %v1389
        %v1391 = vsub.f32 1.5, %v1390
        %v1392 = vmul.f32 %v1387, %v1391
        %vm1393 = vweird.f32 %v1376
        %vm1394 = vweird.f32 %v1387
        %vm1395 = vmor %vm1393, %vm1394
        %v1396 = vsel %vm1395, %v1387, %v1392
        %v1397 = vmul.f32 %v1365, %v1386
        %v1398 = vmul.f32 %v1366, %v1396
        %v1400 = vperm.slane %v1350, 0
        %v1402 = vmul.f32 %v1397, %v1400
        %v1403 = vmul.f32 %v1398, %v1400
        %v1405 = vperm.slane %v1351, 0
        %v1407 = vadd.f32 %v1402, %v1405
        %v1408 = vadd.f32 %v1403, %v1405
        %v1409 = vpack.c.bf16 %v1408, %v1407
        %v1410 = vld [vmem:[#allocation11] sm:$0xff]
        %v1411 = vld [vmem:[#allocation11 + $0x8] sm:$0xff]
        %v1412 = vld [vmem:[#allocation11 + $0x10] sm:$0xff]
        %v1413 = vld [vmem:[#allocation11 + $0x18] sm:$0xff]
        %v1414 = vld [vmem:[#allocation11 + $0x20] sm:$0xff]
        %v1415 = vld [vmem:[#allocation11 + $0x28] sm:$0xff]
        %v1416 = vld [vmem:[#allocation11 + $0x30] sm:$0xff]
        %v1417 = vld [vmem:[#allocation11 + $0x38] sm:$0xff]
        %v1418 = vld [vmem:[#allocation11 + $0x40] sm:$0xff]
        %v1419 = vld [vmem:[#allocation11 + $0x48] sm:$0xff]
        %v1420 = vld [vmem:[#allocation11 + $0x50] sm:$0xff]
        %v1421 = vld [vmem:[#allocation11 + $0x58] sm:$0xff]
        %v1422 = vld [vmem:[#allocation11 + $0x60] sm:$0xff]
        %v1423 = vld [vmem:[#allocation11 + $0x68] sm:$0xff]
        %v1424 = vld [vmem:[#allocation11 + $0x70] sm:$0xff]
        %v1425 = vld [vmem:[#allocation11 + $0x78] sm:$0xff]
        %v1426 = vld [vmem:[%s9] sm:$0x3]
        %v1428 = vperm.slane %v1426, 0
        %v1429 = vperm.slane %v1426, 1
        %v1448 = vunpack.c.l.b16 %v1410
        %v1449 = vunpack.c.h.b16 %v1410
        %v1450 = vunpack.c.l.b16 %v1411
        %v1451 = vunpack.c.h.b16 %v1411
        %v1452 = vunpack.c.l.b16 %v1412
        %v1453 = vunpack.c.h.b16 %v1412
        %v1454 = vunpack.c.l.b16 %v1413
        %v1455 = vunpack.c.h.b16 %v1413
        %v1456 = vunpack.c.l.b16 %v1414
        %v1457 = vunpack.c.h.b16 %v1414
        %v1458 = vunpack.c.l.b16 %v1415
        %v1459 = vunpack.c.h.b16 %v1415
        %v1460 = vunpack.c.l.b16 %v1416
        %v1461 = vunpack.c.h.b16 %v1416
        %v1462 = vunpack.c.l.b16 %v1417
        %v1463 = vunpack.c.h.b16 %v1417
        %v1464 = vunpack.c.l.b16 %v1418
        %v1465 = vunpack.c.h.b16 %v1418
        %v1466 = vunpack.c.l.b16 %v1419
        %v1467 = vunpack.c.h.b16 %v1419
        %v1468 = vunpack.c.l.b16 %v1420
        %v1469 = vunpack.c.h.b16 %v1420
        %v1470 = vunpack.c.l.b16 %v1421
        %v1471 = vunpack.c.h.b16 %v1421
        %v1472 = vunpack.c.l.b16 %v1422
        %v1473 = vunpack.c.h.b16 %v1422
        %v1474 = vunpack.c.l.b16 %v1423
        %v1475 = vunpack.c.h.b16 %v1423
        %v1476 = vunpack.c.l.b16 %v1424
        %v1477 = vunpack.c.h.b16 %v1424
        %v1478 = vunpack.c.l.b16 %v1425
        %v1479 = vunpack.c.h.b16 %v1425
        %v1480 = vpack.c.b16 %v1450, %v1448
        %v1481 = vpack.c.b16 %v1451, %v1449
        %v1482 = vpack.c.b16 %v1454, %v1452
        %v1483 = vpack.c.b16 %v1455, %v1453
        %v1484 = vpack.c.b16 %v1458, %v1456
        %v1485 = vpack.c.b16 %v1459, %v1457
        %v1486 = vpack.c.b16 %v1462, %v1460
        %v1487 = vpack.c.b16 %v1463, %v1461
        %v1488 = vpack.c.b16 %v1466, %v1464
        %v1489 = vpack.c.b16 %v1467, %v1465
        %v1490 = vpack.c.b16 %v1470, %v1468
        %v1491 = vpack.c.b16 %v1471, %v1469
        %v1492 = vpack.c.b16 %v1474, %v1472
        %v1493 = vpack.c.b16 %v1475, %v1473
        %v1494 = vpack.c.b16 %v1478, %v1476
        %v1495 = vpack.c.b16 %v1479, %v1477
        %1512 = vmatpush.bf16.msra.mxu0 %v1494
        %1513 = vmatpush.bf16.msra.mxu0 %v1492
        %1514 = vmatpush.bf16.msra.mxu0 %v1490
        %1515 = vmatpush.bf16.msra.mxu0 %v1488
        %1516 = vmatpush.bf16.msra.mxu0 %v1486
        %1517 = vmatpush.bf16.msra.mxu0 %v1484
        %1518 = vmatpush.bf16.msra.mxu0 %v1482
        %1519 = vmatpush.bf16.msra.mxu0 %v1480
        %1520 = vmatmul.bf16.gmra.mxu0 %v1409
        %v1521 = vpop.f32.mrf.mxu0
        %v1522 = vadd.f32 %v1428, %v1521
        %v1523 = vpop.f32.mrf.mxu0
        %v1524 = vadd.f32 %v1428, %v1523
        %1525 = vdwg.mxu0
        %1526 = vmatpush.bf16.msra.mxu0 %v1495
        %1527 = vmatpush.bf16.msra.mxu0 %v1493
        %1528 = vmatpush.bf16.msra.mxu0 %v1491
        %1529 = vmatpush.bf16.msra.mxu0 %v1489
        %1530 = vmatpush.bf16.msra.mxu0 %v1487
        %1531 = vmatpush.bf16.msra.mxu0 %v1485
        %1532 = vmatpush.bf16.msra.mxu0 %v1483
        %1533 = vmatpush.bf16.msra.mxu0 %v1481
        %1534 = vmatmul.bf16.gmra.mxu0 %v1409
        %v1535 = vpop.f32.mrf.mxu0
        %v1536 = vadd.f32 %v1429, %v1535
        %v1537 = vpop.f32.mrf.mxu0
        %v1538 = vadd.f32 %v1429, %v1537
        %1539 = vdwg.mxu0
        %v1540 = vmax.f32 %v1522, 0.0
        %v1541 = vmax.f32 %v1536, 0.0
        %v1542 = vmax.f32 %v1524, 0.0
        %v1543 = vmax.f32 %v1538, 0.0
        %v1544 = vpack.c.bf16 %v1542, %v1540
        %v1545 = vpack.c.bf16 %v1543, %v1541
        %v1546 = vld [vmem:[#allocation13] sm:$0xf]
        %v1547 = vld [vmem:[#allocation13 + $0x4] sm:$0xf]
        %v1548 = vld [vmem:[#allocation13 + $0x8] sm:$0xf]
        %v1549 = vld [vmem:[#allocation13 + $0xc] sm:$0xf]
        %v1550 = vld [vmem:[#allocation13 + $0x10] sm:$0xf]
        %v1551 = vld [vmem:[#allocation13 + $0x14] sm:$0xf]
        %v1552 = vld [vmem:[#allocation13 + $0x18] sm:$0xf]
        %v1553 = vld [vmem:[#allocation13 + $0x1c] sm:$0xf]
        %v1554 = vld [vmem:[#allocation13 + $0x20] sm:$0xf]
        %v1555 = vld [vmem:[#allocation13 + $0x24] sm:$0xf]
        %v1556 = vld [vmem:[#allocation13 + $0x28] sm:$0xf]
        %v1557 = vld [vmem:[#allocation13 + $0x2c] sm:$0xf]
        %v1558 = vld [vmem:[#allocation13 + $0x30] sm:$0xf]
        %v1559 = vld [vmem:[#allocation13 + $0x34] sm:$0xf]
        %v1560 = vld [vmem:[#allocation13 + $0x38] sm:$0xf]
        %v1561 = vld [vmem:[#allocation13 + $0x3c] sm:$0xf]
        %v1562 = vld [vmem:[#allocation13 + $0x40] sm:$0xf]
        %v1563 = vld [vmem:[#allocation13 + $0x44] sm:$0xf]
        %v1564 = vld [vmem:[#allocation13 + $0x48] sm:$0xf]
        %v1565 = vld [vmem:[#allocation13 + $0x4c] sm:$0xf]
        %v1566 = vld [vmem:[#allocation13 + $0x50] sm:$0xf]
        %v1567 = vld [vmem:[#allocation13 + $0x54] sm:$0xf]
        %v1568 = vld [vmem:[#allocation13 + $0x58] sm:$0xf]
        %v1569 = vld [vmem:[#allocation13 + $0x5c] sm:$0xf]
        %v1570 = vld [vmem:[#allocation13 + $0x60] sm:$0xf]
        %v1571 = vld [vmem:[#allocation13 + $0x64] sm:$0xf]
        %v1572 = vld [vmem:[#allocation13 + $0x68] sm:$0xf]
        %v1573 = vld [vmem:[#allocation13 + $0x6c] sm:$0xf]
        %v1574 = vld [vmem:[#allocation13 + $0x70] sm:$0xf]
        %v1575 = vld [vmem:[#allocation13 + $0x74] sm:$0xf]
        %v1576 = vld [vmem:[#allocation13 + $0x78] sm:$0xf]
        %v1577 = vld [vmem:[#allocation13 + $0x7c] sm:$0xf]
        %v1578 = vld [vmem:[%s11] sm:$0x1]
        %v1580 = vperm.slane %v1578, 0
        %v1614 = vunpack.c.l.b16 %v1546
        %v1615 = vunpack.c.l.b16 %v1547
        %v1616 = vunpack.c.l.b16 %v1548
        %v1617 = vunpack.c.l.b16 %v1549
        %v1618 = vunpack.c.l.b16 %v1550
        %v1619 = vunpack.c.l.b16 %v1551
        %v1620 = vunpack.c.l.b16 %v1552
        %v1621 = vunpack.c.l.b16 %v1553
        %v1622 = vunpack.c.l.b16 %v1554
        %v1623 = vunpack.c.l.b16 %v1555
        %v1624 = vunpack.c.l.b16 %v1556
        %v1625 = vunpack.c.l.b16 %v1557
        %v1626 = vunpack.c.l.b16 %v1558
        %v1627 = vunpack.c.l.b16 %v1559
        %v1628 = vunpack.c.l.b16 %v1560
        %v1629 = vunpack.c.l.b16 %v1561
        %v1630 = vunpack.c.l.b16 %v1562
        %v1631 = vunpack.c.l.b16 %v1563
        %v1632 = vunpack.c.l.b16 %v1564
        %v1633 = vunpack.c.l.b16 %v1565
        %v1634 = vunpack.c.l.b16 %v1566
        %v1635 = vunpack.c.l.b16 %v1567
        %v1636 = vunpack.c.l.b16 %v1568
        %v1637 = vunpack.c.l.b16 %v1569
        %v1638 = vunpack.c.l.b16 %v1570
        %v1639 = vunpack.c.l.b16 %v1571
        %v1640 = vunpack.c.l.b16 %v1572
        %v1641 = vunpack.c.l.b16 %v1573
        %v1642 = vunpack.c.l.b16 %v1574
        %v1643 = vunpack.c.l.b16 %v1575
        %v1644 = vunpack.c.l.b16 %v1576
        %v1645 = vunpack.c.l.b16 %v1577
        %v1646 = vpack.c.b16 %v1615, %v1614
        %v1647 = vpack.c.b16 %v1617, %v1616
        %v1648 = vpack.c.b16 %v1619, %v1618
        %v1649 = vpack.c.b16 %v1621, %v1620
        %v1650 = vpack.c.b16 %v1623, %v1622
        %v1651 = vpack.c.b16 %v1625, %v1624
        %v1652 = vpack.c.b16 %v1627, %v1626
        %v1653 = vpack.c.b16 %v1629, %v1628
        %v1654 = vpack.c.b16 %v1631, %v1630
        %v1655 = vpack.c.b16 %v1633, %v1632
        %v1656 = vpack.c.b16 %v1635, %v1634
        %v1657 = vpack.c.b16 %v1637, %v1636
        %v1658 = vpack.c.b16 %v1639, %v1638
        %v1659 = vpack.c.b16 %v1641, %v1640
        %v1660 = vpack.c.b16 %v1643, %v1642
        %v1661 = vpack.c.b16 %v1645, %v1644
        %1678 = vmatpush.bf16.msra.mxu0 %v1653
        %1679 = vmatpush.bf16.msra.mxu0 %v1652
        %1680 = vmatpush.bf16.msra.mxu0 %v1651
        %1681 = vmatpush.bf16.msra.mxu0 %v1650
        %1682 = vmatpush.bf16.msra.mxu0 %v1649
        %1683 = vmatpush.bf16.msra.mxu0 %v1648
        %1684 = vmatpush.bf16.msra.mxu0 %v1647
        %1685 = vmatpush.bf16.msra.mxu0 %v1646
        %1686 = vmatmul.bf16.gmra.mxu0 %v1544
        %v1687 = vpop.f32.mrf.mxu0
        %v1688 = vadd.f32 %v1580, %v1687
        %v1689 = vpop.f32.mrf.mxu0
        %v1690 = vadd.f32 %v1580, %v1689
        %1691 = vdwg.mxu0
        %1692 = vmatpush.bf16.msra.mxu0 %v1661
        %1693 = vmatpush.bf16.msra.mxu0 %v1660
        %1694 = vmatpush.bf16.msra.mxu0 %v1659
        %1695 = vmatpush.bf16.msra.mxu0 %v1658
        %1696 = vmatpush.bf16.msra.mxu0 %v1657
        %1697 = vmatpush.bf16.msra.mxu0 %v1656
        %1698 = vmatpush.bf16.msra.mxu0 %v1655
        %1699 = vmatpush.bf16.msra.mxu0 %v1654
        %1700 = vmatmul.bf16.gmra.mxu0 %v1545
        %v1701 = vpop.f32.mrf.mxu0
        %v1702 = vadd.f32 %v1688, %v1701
        %v1703 = vpop.f32.mrf.mxu0
        %v1704 = vadd.f32 %v1690, %v1703
        %1705 = vdwg.mxu0
        %v1706 = vadd.f32 %v1702, %v1407
        %v1707 = vadd.f32 %v1704, %v1408
        %v1708 = vld [vmem:[%s12] sm:$0x1]
        %v1709 = vld [vmem:[%s13] sm:$0x1]
        %1710 = vadd.xlane.f32.xlu0 %v1706
        %v1711 = vpop.xlane.xlu0 %1710
        %1712 = vadd.xlane.f32.xlu0 %v1707
        %v1713 = vpop.xlane.xlu0 %1712
        %v1714 = vmul.f32 %v1711, %v1362
        %v1715 = vmul.f32 %v1713, %v1362
        %v1716 = vsub.f32 %v1706, %v1714
        %v1717 = vsub.f32 %v1707, %v1715
        %v1718 = vmul.f32 %v1716, %v1716
        %v1719 = vmul.f32 %v1717, %v1717
        %1720 = vadd.xlane.f32.xlu0 %v1718
        %v1721 = vpop.xlane.xlu0 %1720
        %1722 = vadd.xlane.f32.xlu0 %v1719
        %v1723 = vpop.xlane.xlu0 %1722
        %v1724 = vmul.f32 %v1721, %v1362
        %v1725 = vmul.f32 %v1723, %v1362
        %v1726 = vadd.f32 %v1724, 1e-05
        %v1727 = vadd.f32 %v1725, 1e-05
        %v1728 = vrsqrt.pop %v1726
        %v1729 = vmul.f32 %v1728, %v1726
        %v1730 = vmul.f32 %v1729, %v1728
        %v1731 = vmul.f32 0.5, %v1730
        %v1732 = vsub.f32 1.5, %v1731
        %v1733 = vmul.f32 %v1728, %v1732
        %vm1734 = vweird.f32 %v1726
        %vm1735 = vweird.f32 %v1728
        %vm1736 = vmor %vm1734, %vm1735
        %v1737 = vsel %vm1736, %v1728, %v1733
        %v1738 = vrsqrt.pop %v1727
        %v1739 = vmul.f32 %v1738, %v1727
        %v1740 = vmul.f32 %v1739, %v1738
        %v1741 = vmul.f32 0.5, %v1740
        %v1742 = vsub.f32 1.5, %v1741
        %v1743 = vmul.f32 %v1738, %v1742
        %vm1744 = vweird.f32 %v1727
        %vm1745 = vweird.f32 %v1738
        %vm1746 = vmor %vm1744, %vm1745
        %v1747 = vsel %vm1746, %v1738, %v1743
        %v1748 = vmul.f32 %v1716, %v1737
        %v1749 = vmul.f32 %v1717, %v1747
        %v1751 = vperm.slane %v1708, 0
        %v1753 = vmul.f32 %v1748, %v1751
        %v1754 = vmul.f32 %v1749, %v1751
        %v1756 = vperm.slane %v1709, 0
        %v1758 = vadd.f32 %v1753, %v1756
        %v1759 = vadd.f32 %v1754, %v1756
        %1760 = vst [vmem:[%s609] sm:$0xff] %v1758
        %1761 = vst [vmem:[%s609 + $0x8] sm:$0xff] %v1759
        %s1762 = sand.u32 %s348, 1
        %s1763 = scalar_lea.sflag [#allocation4], %s1762
        %s1764 = sand.u32 %s348, 1
        %s1765 = smul.addr %s1764, 16
        %s1766 = scalar_lea.vmem [#allocation14], %s1765
        // Predicated region
        $region105: #{tpu_custom_call.1} parent=75 // pred_check
          %p1767 = pneg %p358
        $region106: #{tpu_custom_call.1} parent=75 // pred_check_branch
          %1769 = sbr.rel (%p1767) target = $region108
        $region107: #{tpu_custom_call.1} parent=75 // pred_region
          %1771 = vsyncadd %s1763, 0
          %s1772 = smul.addr %s36, 2
          %s1773 = smul.addr %s1772, 8
          %s1774 = scalar_lea.hbm %s14, %s1773
          %s1775 = sshll.u32 %s1766, 4
          %s1776 = int_to_ptr.vmem [resolvable:$true] %s1775
          %s1777 = sshll.u32 %s1774, 4
          %s1778 = int_to_ptr.hbm [resolvable:$true] %s1777
          %1783 = dma.vmem_to_hbm [thread:$0]  %s1776, 256, %s1778, %s1763, 128, 128, 8
        $region108: #{tpu_custom_call.1} parent=75 // pred_fallthru
          _
      $region76: #{tpu_custom_call.1} parent=5 // pred_fallthru
        _
      %p1784 = scmp.le.s32.totalorder 2, %s31
      // Predicated region
      $region109: #{tpu_custom_call.1} parent=5 // pred_check
        %p1785 = pneg %p1784
      $region110: #{tpu_custom_call.1} parent=5 // pred_check_branch
        %1787 = sbr.rel (%p1785) target = $region112
      $region111: #{tpu_custom_call.1} parent=5 // pred_region
        %s1788 = ssub.s32 %s31, 2
        // Predicated region
        $region113: #{tpu_custom_call.1} parent=111 // pred_check
          %p1789 = pneg %p364
        $region114: #{tpu_custom_call.1} parent=111 // pred_check_branch
          %1791 = sbr.rel (%p1789) target = $region116
        $region115: #{tpu_custom_call.1} parent=111 // pred_region
          %s1792 = sand.u32 %s349, 1
          %s1793 = scalar_lea.sflag [#allocation4], %s1792
          %s1794 = sand.u32 %s349, 1
          %s1795 = smul.addr %s1794, 16
          %s1796 = scalar_lea.vmem [#allocation14], %s1795
          %1798 = dma.done %s1793, 256
        $region116: #{tpu_custom_call.1} parent=111 // pred_fallthru
          _
      $region112: #{tpu_custom_call.1} parent=5 // pred_fallthru
        _
    $region6: #{tpu_custom_call.1} parent=1 // loop_footer
      %s35 = sadd.s32 1, %s31
    $region7: #{tpu_custom_call.1} parent=1 // loop_footer_branch
      %30 = sbr.rel target = $region3
    $region8: #{tpu_custom_call.1} parent=1 // loop_exit
      _
    %1799 = vsyncpa [#allocation3], 1
    %s1800 = scalar_lea.sflag [#allocation3], 1
    %1801 = vsyncpa %s1800, 1
    %1802 = vsyncpa [#allocation6], 1
    %s1803 = scalar_lea.sflag [#allocation6], 1
    %1804 = vsyncpa %s1803, 1
    %1805 = vsyncpa [#allocation9], 1
    %1806 = vsyncpa [#allocation12], 1
    %1807 = vsyncpa [#allocation4], 1
    %s1808 = scalar_lea.sflag [#allocation4], 1
    %1809 = vsyncpa %s1808, 1

</llo_original>
